<compile_context>
chip_gen: v7x
topology: tpu7x:2x2x1
jax: 0.10.0
libtpu: 0.0.40
codegen_flags: <defaults>
</compile_context>

<pallas_src>
import functools

import jax
import jax.numpy as jnp
from jax import lax
from jax.experimental import pallas as pl
from jax.experimental.pallas import tpu as pltpu


# ---------------------------------------------------------------------------
# Fused kernel: whole Residual stack for one activation block (all blocks,
# all pixels in the block) in a single invocation.
# ---------------------------------------------------------------------------
def _residual_kernel(x_ref, w1_ref, b1_ref, a1_ref, wdw_ref, b2_ref, a2_ref,
                     w3_ref, b3_ref, mask_ref, out_ref, *, width):
    chans, m = x_ref.shape                       # channel-major block (C, M)
    num_block, groups, _ = b1_ref.shape

    x = x_ref[...]                               # activation stays VMEM/vreg resident

    for b in range(num_block):                   # small num_block -> static unroll
        short_cut = x

        # ---- 1x1 conv C->G (BN scale pre-folded) + bias + PReLU -----------
        # VPU broadcast-FMA instead of a near-empty MXU dot (K = C = 4).
        w1 = w1_ref[b]                                         # (G, C)
        y = b1_ref[b] + w1[:, 0:1] * x[0:1, :]                 # (G, M)
        for c in range(1, chans):
            y = y + w1[:, c:c + 1] * x[c:c + 1, :]
        y = jnp.where(y > 0, y, a1_ref[b] * y)

        # ---- depthwise 3x3, stride 1, pad 1: rolls + factored masks -------
        # Column masks are applied pre-roll (valid per dx, independent of dy);
        # row masks are applied once per dy group of 3 taps.
        wdw = wdw_ref[b]                                       # (9, G, 1)
        y_l = pltpu.roll(y, shift=1, axis=1) * mask_ref[0:1, :]      # src col w-1
        y_r = pltpu.roll(y, shift=m - 1, axis=1) * mask_ref[1:2, :]  # src col w+1

        def row_sum(r):                    # r = dy + 1; taps ordered dx=-1,0,+1
            return (wdw[3 * r + 0] * y_l + wdw[3 * r + 1] * y
                    + wdw[3 * r + 2] * y_r)

        acc = row_sum(1)                                                          # dy =  0
        acc = acc + pltpu.roll(row_sum(0), shift=width, axis=1) * mask_ref[2:3, :]     # dy = -1
        acc = acc + pltpu.roll(row_sum(2), shift=m - width, axis=1) * mask_ref[3:4, :] # dy = +1
        z = acc + b2_ref[b]
        z = jnp.where(z > 0, z, a2_ref[b] * z)                  # (G, M)

        # ---- 1x1 projection G->C (BN scale pre-folded) + bias + residual --
        w3 = w3_ref[b]                                          # (C, G)
        p = b3_ref[b] + w3[:, 0:1] * z[0:1, :]                  # (C, M)
        for g in range(1, groups):
            p = p + w3[:, g:g + 1] * z[g:g + 1, :]
        x = short_cut + p

    out_ref[...] = x


# ---------------------------------------------------------------------------
# Host-side parameter folding / packing (eval-mode BN folded into weights)
# ---------------------------------------------------------------------------
def _fold_bn(gamma, beta, mean, var, eps=1e-5):
    scale = gamma / jnp.sqrt(var + eps)
    bias = beta - mean * scale
    return scale, bias


def pack_block_params(block_params):
    """Fold BN into conv weights and stack all blocks for the fused kernel."""
    w1s, b1s, a1s, wdws, b2s, a2s, w3s, b3s = ([] for _ in range(8))
    for p in block_params:
        s1, b1 = _fold_bn(*p["bn1"])
        s2, b2 = _fold_bn(*p["bn2"])
        s3, b3 = _fold_bn(*p["bn3"])
        g = p["w1"].shape[0]
        w1s.append(p["w1"] * s1[:, None])                      # (G, C)
        b1s.append(b1[:, None])                                # (G, 1)
        a1s.append(p["a1"][:, None])                           # (G, 1)
        wdws.append((p["wdw"] * s2[:, None, None])             # (G, 3, 3)
                    .reshape(g, 9).T[:, :, None])              # (9, G, 1)
        b2s.append(b2[:, None])                                # (G, 1)
        a2s.append(p["a2"][:, None])                           # (G, 1)
        w3s.append(p["w3"] * s3[:, None])                      # (C, G)
        b3s.append(b3[:, None])                                # (C, 1)
    st = lambda xs: jnp.stack(xs, axis=0)
    return {"w1": st(w1s), "b1": st(b1s), "a1": st(a1s), "wdw": st(wdws),
            "b2": st(b2s), "a2": st(a2s), "w3": st(w3s), "b3": st(b3s)}


def make_boundary_masks(batch, height, width):
    """Factored boundary masks, (4, N*H*W) f32, computed once host-side.

    Rows: [col dx=-1 valid, col dx=+1 valid, row dy=-1 valid, row dy=+1 valid],
    all evaluated at the output position (layout m = n*H*W + h*W + w).
    """
    hw = height * width
    p = jnp.arange(hw, dtype=jnp.int32)
    h = p // width
    w = p % width
    m = jnp.stack([w >= 1, w < width - 1, h >= 1, h < height - 1], axis=0)
    m = m.astype(jnp.float32)                    # (4, H*W)
    return jnp.tile(m, (1, batch))               # (4, N*H*W)


# ---------------------------------------------------------------------------
# Jitted entry point: channel-major (C, N*H*W) in / out, single pallas_call.
# ---------------------------------------------------------------------------
@functools.partial(jax.jit, static_argnames=("height", "width", "batch", "megacore"))
def residual_forward(x_cm, packed, masks, *, height, width, batch, megacore=False):
    """Residual.forward (eval mode) on a channel-major activation slab.

    x_cm: (C, N*H*W) float32, flattened as m = n*H*W + h*W + w.
    megacore=True adds a per-image grid axis (use on v7x, 2 TensorCores/chip).
    """
    C, M = x_cm.shape
    kernel = functools.partial(_residual_kernel, width=width)
    out_shape = jax.ShapeDtypeStruct((C, M), jnp.float32)
    operands = (x_cm, packed["w1"], packed["b1"], packed["a1"], packed["wdw"],
                packed["b2"], packed["a2"], packed["w3"], packed["b3"], masks)

    if not megacore:
        # Grid-less: one invocation, everything resident in VMEM (~0.2 MiB).
        # TODO(synk): at realistic C/G/H/W/N re-derive the VMEM budget, set
        # pltpu.CompilerParams(vmem_limit_bytes=...) and tile M.
        vmem = pltpu.MemorySpace.VMEM
        return pl.pallas_call(
            kernel,
            out_shape=out_shape,
            in_specs=[pl.BlockSpec(memory_space=vmem)] * len(operands),
            out_specs=pl.BlockSpec(memory_space=vmem),
            input_output_aliases={0: 0},        # output reuses x's HBM buffer
        )(*operands)

    # Megacore path: one image (C, H*W) per grid step; boundary handling and
    # masks split cleanly at image boundaries, so correctness is preserved.
    hw = height * width
    act_spec = pl.BlockSpec((C, hw), lambda n: (0, n))
    mask_spec = pl.BlockSpec((4, hw), lambda n: (0, n))
    full = lambda a: pl.BlockSpec(a.shape, lambda n, nd=a.ndim: (0,) * nd)
    in_specs = [act_spec] + [full(a) for a in operands[1:-1]] + [mask_spec]
    return pl.pallas_call(
        kernel,
        out_shape=out_shape,
        grid=(batch,),
        in_specs=in_specs,
        out_specs=act_spec,
        input_output_aliases={0: 0},
        compiler_params=pltpu.CompilerParams(dimension_semantics=("parallel",)),
    )(*operands)


# ---------------------------------------------------------------------------
# Deterministic raw parameters (torch-like layouts) per Depth_Wise block
# ---------------------------------------------------------------------------
def make_block_params(key, c, groups):
    ks = jax.random.split(key, 17)
    # conv (1x1, c -> groups): torch weight (groups, c, 1, 1) -> (G, C)
    w1 = 0.1 * jax.random.normal(ks[0], (groups, c), jnp.float32)
    bn1 = (0.5 + jax.random.uniform(ks[1], (groups,), jnp.float32),   # gamma
           0.1 * jax.random.normal(ks[2], (groups,), jnp.float32),    # beta
           0.1 * jax.random.normal(ks[3], (groups,), jnp.float32),    # mean
           0.5 + jax.random.uniform(ks[4], (groups,), jnp.float32))   # var
    a1 = 0.25 + 0.05 * jax.random.normal(ks[5], (groups,), jnp.float32)
    # conv_dw (3x3 depthwise): torch weight (groups, 1, 3, 3) -> (G, 3, 3)
    wdw = 0.1 * jax.random.normal(ks[6], (groups, 3, 3), jnp.float32)
    bn2 = (0.5 + jax.random.uniform(ks[7], (groups,), jnp.float32),
           0.1 * jax.random.normal(ks[8], (groups,), jnp.float32),
           0.1 * jax.random.normal(ks[9], (groups,), jnp.float32),
           0.5 + jax.random.uniform(ks[10], (groups,), jnp.float32))
    a2 = 0.25 + 0.05 * jax.random.normal(ks[11], (groups,), jnp.float32)
    # project (1x1, groups -> c): torch weight (c, groups, 1, 1) -> (C, G)
    w3 = 0.1 * jax.random.normal(ks[12], (c, groups), jnp.float32)
    bn3 = (0.5 + jax.random.uniform(ks[13], (c,), jnp.float32),
           0.1 * jax.random.normal(ks[14], (c,), jnp.float32),
           0.1 * jax.random.normal(ks[15], (c,), jnp.float32),
           0.5 + jax.random.uniform(ks[16], (c,), jnp.float32))
    return {"w1": w1, "bn1": bn1, "a1": a1,
            "wdw": wdw, "bn2": bn2, "a2": a2,
            "w3": w3, "bn3": bn3}


# ---------------------------------------------------------------------------
# Pure-JAX (XLA) reference, computed from RAW params (checks BN folding too)
# ---------------------------------------------------------------------------
def _bn(x, gamma, beta, mean, var, eps=1e-5):
    return (x - mean) * (gamma / jnp.sqrt(var + eps)) + beta


def _ref_block(x, p):
    G = p["w1"].shape[0]
    y = jnp.einsum("nhwc,gc->nhwg", x, p["w1"])
    y = _bn(y, *p["bn1"])
    y = jnp.where(y > 0, y, p["a1"] * y)
    k = p["wdw"].transpose(1, 2, 0)[:, :, None, :]          # (3, 3, 1, G) HWIO
    z = lax.conv_general_dilated(
        y, k, window_strides=(1, 1), padding=((1, 1), (1, 1)),
        dimension_numbers=("NHWC", "HWIO", "NHWC"), feature_group_count=G)
    z = _bn(z, *p["bn2"])
    z = jnp.where(z > 0, z, p["a2"] * z)
    q = jnp.einsum("nhwg,cg->nhwc", z, p["w3"])
    q = _bn(q, *p["bn3"])
    return x + q


def _ref_forward(x, block_params):
    for p in block_params:
        x = _ref_block(x, p)
    return x


if __name__ == "__main__":
    N, C, H, W = 2, 4, 16, 16        # Residual(c=4, ...), NCHW in torch terms
    GROUPS = 8
    NUM_BLOCK = 2

    root = jax.random.PRNGKey(0)
    kx, kp = jax.random.split(root)
    x_nhwc = jax.random.normal(kx, (N, H, W, C), jnp.float32)

    raw_blocks = tuple(make_block_params(k, C, GROUPS)
                       for k in jax.random.split(kp, NUM_BLOCK))
    packed = pack_block_params(raw_blocks)
    masks = make_boundary_masks(N, H, W)          # host-side, once per shape

    # Test-harness relayout only: in a full network the channel-major
    # (C, N*H*W) slab is the persistent inter-layer activation layout.
    x_cm = jnp.transpose(x_nhwc, (3, 0, 1, 2)).reshape(C, N * H * W)

    ref = _ref_forward(x_nhwc, raw_blocks)

    # Default (grid-less, single invocation) path.
    out_cm = residual_forward(x_cm, packed, masks,
                              height=H, width=W, batch=N, megacore=False)
    out_cm = jax.block_until_ready(out_cm)
    out = out_cm.reshape(C, N, H, W).transpose(1, 2, 3, 0)
    assert out.shape == (N, H, W, C) and out.dtype == jnp.float32
    if not jnp.allclose(out, ref, atol=1e-3, rtol=1e-3):
        err = float(jnp.max(jnp.abs(out - ref)))
        raise AssertionError(f"Pallas kernel mismatch (default path), max abs err {err}")

    # Megacore (per-image grid) path: same kernel body, parallel batch axis.
    out_cm2 = residual_forward(x_cm, packed, masks,
                               height=H, width=W, batch=N, megacore=True)
    out_cm2 = jax.block_until_ready(out_cm2)
    out2 = out_cm2.reshape(C, N, H, W).transpose(1, 2, 3, 0)
    if not jnp.allclose(out2, ref, atol=1e-3, rtol=1e-3):
        err = float(jnp.max(jnp.abs(out2 - ref)))
        raise AssertionError(f"Pallas kernel mismatch (megacore path), max abs err {err}")

    print("KERNEL_OK")
</pallas_src>

<mosaic_0001>
module attributes {stable_mosaic.version = 11 : i64} {
  func.func @_residual_kernel(%arg0: memref<4x512xf32, #tpu.memory_space<vmem>>, %arg1: memref<2x8x4xf32, #tpu.memory_space<vmem>>, %arg2: memref<2x8x1xf32, #tpu.memory_space<vmem>>, %arg3: memref<2x8x1xf32, #tpu.memory_space<vmem>>, %arg4: memref<2x9x8x1xf32, #tpu.memory_space<vmem>>, %arg5: memref<2x8x1xf32, #tpu.memory_space<vmem>>, %arg6: memref<2x8x1xf32, #tpu.memory_space<vmem>>, %arg7: memref<2x4x8xf32, #tpu.memory_space<vmem>>, %arg8: memref<2x4x1xf32, #tpu.memory_space<vmem>>, %arg9: memref<4x512xf32, #tpu.memory_space<vmem>>, %arg10: memref<4x512xf32, #tpu.memory_space<vmem>>) attributes {dimension_semantics = [], scalar_prefetch = 0 : i64, scratch_operands = 0 : i64, tpu.core_type = #tpu.core_type<tc>} {
    %c0 = arith.constant 0 : index
    %c0_0 = arith.constant 0 : index
    %0 = vector.load %arg0[%c0, %c0_0] : memref<4x512xf32, #tpu.memory_space<vmem>>, vector<4x512xf32>
    %c0_1 = arith.constant 0 : index
    %c0_2 = arith.constant 0 : index
    %c0_3 = arith.constant 0 : index
    %1 = vector.load %arg1[%c0_1, %c0_2, %c0_3] : memref<2x8x4xf32, #tpu.memory_space<vmem>>, vector<1x8x4xf32>
    %2 = vector.shape_cast %1 : vector<1x8x4xf32> to vector<8x4xf32>
    %c0_4 = arith.constant 0 : index
    %c0_5 = arith.constant 0 : index
    %c0_6 = arith.constant 0 : index
    %3 = vector.load %arg2[%c0_4, %c0_5, %c0_6] : memref<2x8x1xf32, #tpu.memory_space<vmem>>, vector<1x8x1xf32>
    %4 = vector.shape_cast %3 : vector<1x8x1xf32> to vector<8x1xf32>
    %5 = vector.extract_strided_slice %2 {offsets = [0, 0], sizes = [8, 1], strides = [1, 1]} : vector<8x4xf32> to vector<8x1xf32>
    %6 = vector.extract_strided_slice %0 {offsets = [0, 0], sizes = [1, 512], strides = [1, 1]} : vector<4x512xf32> to vector<1x512xf32>
    %7 = vector.broadcast %5 : vector<8x1xf32> to vector<8x512xf32>
    %8 = vector.broadcast %6 : vector<1x512xf32> to vector<8x512xf32>
    %9 = arith.mulf %7, %8 : vector<8x512xf32>
    %10 = vector.broadcast %4 : vector<8x1xf32> to vector<8x512xf32>
    %11 = arith.addf %10, %9 : vector<8x512xf32>
    %12 = vector.extract_strided_slice %2 {offsets = [0, 1], sizes = [8, 1], strides = [1, 1]} : vector<8x4xf32> to vector<8x1xf32>
    %13 = vector.extract_strided_slice %0 {offsets = [1, 0], sizes = [1, 512], strides = [1, 1]} : vector<4x512xf32> to vector<1x512xf32>
    %14 = vector.broadcast %12 : vector<8x1xf32> to vector<8x512xf32>
    %15 = vector.broadcast %13 : vector<1x512xf32> to vector<8x512xf32>
    %16 = arith.mulf %14, %15 : vector<8x512xf32>
    %17 = arith.addf %11, %16 : vector<8x512xf32>
    %18 = vector.extract_strided_slice %2 {offsets = [0, 2], sizes = [8, 1], strides = [1, 1]} : vector<8x4xf32> to vector<8x1xf32>
    %19 = vector.extract_strided_slice %0 {offsets = [2, 0], sizes = [1, 512], strides = [1, 1]} : vector<4x512xf32> to vector<1x512xf32>
    %20 = vector.broadcast %18 : vector<8x1xf32> to vector<8x512xf32>
    %21 = vector.broadcast %19 : vector<1x512xf32> to vector<8x512xf32>
    %22 = arith.mulf %20, %21 : vector<8x512xf32>
    %23 = arith.addf %17, %22 : vector<8x512xf32>
    %24 = vector.extract_strided_slice %2 {offsets = [0, 3], sizes = [8, 1], strides = [1, 1]} : vector<8x4xf32> to vector<8x1xf32>
    %25 = vector.extract_strided_slice %0 {offsets = [3, 0], sizes = [1, 512], strides = [1, 1]} : vector<4x512xf32> to vector<1x512xf32>
    %26 = vector.broadcast %24 : vector<8x1xf32> to vector<8x512xf32>
    %27 = vector.broadcast %25 : vector<1x512xf32> to vector<8x512xf32>
    %28 = arith.mulf %26, %27 : vector<8x512xf32>
    %29 = arith.addf %23, %28 : vector<8x512xf32>
    %cst = arith.constant 0.000000e+00 : f32
    %30 = vector.broadcast %cst : f32 to vector<8x512xf32>
    %31 = arith.cmpf ogt, %29, %30 : vector<8x512xf32>
    %c0_7 = arith.constant 0 : index
    %c0_8 = arith.constant 0 : index
    %c0_9 = arith.constant 0 : index
    %32 = vector.load %arg3[%c0_7, %c0_8, %c0_9] : memref<2x8x1xf32, #tpu.memory_space<vmem>>, vector<1x8x1xf32>
    %33 = vector.shape_cast %32 : vector<1x8x1xf32> to vector<8x1xf32>
    %34 = vector.broadcast %33 : vector<8x1xf32> to vector<8x512xf32>
    %35 = arith.mulf %34, %29 : vector<8x512xf32>
    %36 = arith.select %31, %29, %35 : vector<8x512xi1>, vector<8x512xf32>
    %c0_10 = arith.constant 0 : index
    %c0_11 = arith.constant 0 : index
    %c0_12 = arith.constant 0 : index
    %c0_13 = arith.constant 0 : index
    %37 = vector.load %arg4[%c0_10, %c0_11, %c0_12, %c0_13] : memref<2x9x8x1xf32, #tpu.memory_space<vmem>>, vector<1x9x8x1xf32>
    %38 = vector.shape_cast %37 : vector<1x9x8x1xf32> to vector<9x8x1xf32>
    %c1_i32 = arith.constant 1 : i32
    %39 = tpu.dynamic_rotate %36 by %c1_i32 dim 1 : vector<8x512xf32>, i32 -> vector<8x512xf32>
    %c0_14 = arith.constant 0 : index
    %c0_15 = arith.constant 0 : index
    %40 = vector.load %arg9[%c0_14, %c0_15] : memref<4x512xf32, #tpu.memory_space<vmem>>, vector<1x512xf32>
    %41 = vector.broadcast %40 : vector<1x512xf32> to vector<8x512xf32>
    %42 = arith.mulf %39, %41 : vector<8x512xf32>
    %c511_i32 = arith.constant 511 : i32
    %43 = tpu.dynamic_rotate %36 by %c511_i32 dim 1 : vector<8x512xf32>, i32 -> vector<8x512xf32>
    %c1 = arith.constant 1 : index
    %c0_16 = arith.constant 0 : index
    %44 = vector.load %arg9[%c1, %c0_16] : memref<4x512xf32, #tpu.memory_space<vmem>>, vector<1x512xf32>
    %45 = vector.broadcast %44 : vector<1x512xf32> to vector<8x512xf32>
    %46 = arith.mulf %43, %45 : vector<8x512xf32>
    %47 = vector.extract_strided_slice %38 {offsets = [3, 0, 0], sizes = [1, 8, 1], strides = [1, 1, 1]} : vector<9x8x1xf32> to vector<1x8x1xf32>
    %48 = vector.shape_cast %47 : vector<1x8x1xf32> to vector<8x1xf32>
    %49 = vector.broadcast %48 : vector<8x1xf32> to vector<8x512xf32>
    %50 = arith.mulf %49, %42 : vector<8x512xf32>
    %51 = vector.extract_strided_slice %38 {offsets = [4, 0, 0], sizes = [1, 8, 1], strides = [1, 1, 1]} : vector<9x8x1xf32> to vector<1x8x1xf32>
    %52 = vector.shape_cast %51 : vector<1x8x1xf32> to vector<8x1xf32>
    %53 = vector.broadcast %52 : vector<8x1xf32> to vector<8x512xf32>
    %54 = arith.mulf %53, %36 : vector<8x512xf32>
    %55 = arith.addf %50, %54 : vector<8x512xf32>
    %56 = vector.extract_strided_slice %38 {offsets = [5, 0, 0], sizes = [1, 8, 1], strides = [1, 1, 1]} : vector<9x8x1xf32> to vector<1x8x1xf32>
    %57 = vector.shape_cast %56 : vector<1x8x1xf32> to vector<8x1xf32>
    %58 = vector.broadcast %57 : vector<8x1xf32> to vector<8x512xf32>
    %59 = arith.mulf %58, %46 : vector<8x512xf32>
    %60 = arith.addf %55, %59 : vector<8x512xf32>
    %61 = vector.extract_strided_slice %38 {offsets = [0, 0, 0], sizes = [1, 8, 1], strides = [1, 1, 1]} : vector<9x8x1xf32> to vector<1x8x1xf32>
    %62 = vector.shape_cast %61 : vector<1x8x1xf32> to vector<8x1xf32>
    %63 = vector.broadcast %62 : vector<8x1xf32> to vector<8x512xf32>
    %64 = arith.mulf %63, %42 : vector<8x512xf32>
    %65 = vector.extract_strided_slice %38 {offsets = [1, 0, 0], sizes = [1, 8, 1], strides = [1, 1, 1]} : vector<9x8x1xf32> to vector<1x8x1xf32>
    %66 = vector.shape_cast %65 : vector<1x8x1xf32> to vector<8x1xf32>
    %67 = vector.broadcast %66 : vector<8x1xf32> to vector<8x512xf32>
    %68 = arith.mulf %67, %36 : vector<8x512xf32>
    %69 = arith.addf %64, %68 : vector<8x512xf32>
    %70 = vector.extract_strided_slice %38 {offsets = [2, 0, 0], sizes = [1, 8, 1], strides = [1, 1, 1]} : vector<9x8x1xf32> to vector<1x8x1xf32>
    %71 = vector.shape_cast %70 : vector<1x8x1xf32> to vector<8x1xf32>
    %72 = vector.broadcast %71 : vector<8x1xf32> to vector<8x512xf32>
    %73 = arith.mulf %72, %46 : vector<8x512xf32>
    %74 = arith.addf %69, %73 : vector<8x512xf32>
    %c16_i32 = arith.constant 16 : i32
    %75 = tpu.dynamic_rotate %74 by %c16_i32 dim 1 : vector<8x512xf32>, i32 -> vector<8x512xf32>
    %c2 = arith.constant 2 : index
    %c0_17 = arith.constant 0 : index
    %76 = vector.load %arg9[%c2, %c0_17] : memref<4x512xf32, #tpu.memory_space<vmem>>, vector<1x512xf32>
    %77 = vector.broadcast %76 : vector<1x512xf32> to vector<8x512xf32>
    %78 = arith.mulf %75, %77 : vector<8x512xf32>
    %79 = arith.addf %60, %78 : vector<8x512xf32>
    %80 = vector.extract_strided_slice %38 {offsets = [6, 0, 0], sizes = [1, 8, 1], strides = [1, 1, 1]} : vector<9x8x1xf32> to vector<1x8x1xf32>
    %81 = vector.shape_cast %80 : vector<1x8x1xf32> to vector<8x1xf32>
    %82 = vector.broadcast %81 : vector<8x1xf32> to vector<8x512xf32>
    %83 = arith.mulf %82, %42 : vector<8x512xf32>
    %84 = vector.extract_strided_slice %38 {offsets = [7, 0, 0], sizes = [1, 8, 1], strides = [1, 1, 1]} : vector<9x8x1xf32> to vector<1x8x1xf32>
    %85 = vector.shape_cast %84 : vector<1x8x1xf32> to vector<8x1xf32>
    %86 = vector.broadcast %85 : vector<8x1xf32> to vector<8x512xf32>
    %87 = arith.mulf %86, %36 : vector<8x512xf32>
    %88 = arith.addf %83, %87 : vector<8x512xf32>
    %89 = vector.extract_strided_slice %38 {offsets = [8, 0, 0], sizes = [1, 8, 1], strides = [1, 1, 1]} : vector<9x8x1xf32> to vector<1x8x1xf32>
    %90 = vector.shape_cast %89 : vector<1x8x1xf32> to vector<8x1xf32>
    %91 = vector.broadcast %90 : vector<8x1xf32> to vector<8x512xf32>
    %92 = arith.mulf %91, %46 : vector<8x512xf32>
    %93 = arith.addf %88, %92 : vector<8x512xf32>
    %c496_i32 = arith.constant 496 : i32
    %94 = tpu.dynamic_rotate %93 by %c496_i32 dim 1 : vector<8x512xf32>, i32 -> vector<8x512xf32>
    %c3 = arith.constant 3 : index
    %c0_18 = arith.constant 0 : index
    %95 = vector.load %arg9[%c3, %c0_18] : memref<4x512xf32, #tpu.memory_space<vmem>>, vector<1x512xf32>
    %96 = vector.broadcast %95 : vector<1x512xf32> to vector<8x512xf32>
    %97 = arith.mulf %94, %96 : vector<8x512xf32>
    %98 = arith.addf %79, %97 : vector<8x512xf32>
    %c0_19 = arith.constant 0 : index
    %c0_20 = arith.constant 0 : index
    %c0_21 = arith.constant 0 : index
    %99 = vector.load %arg5[%c0_19, %c0_20, %c0_21] : memref<2x8x1xf32, #tpu.memory_space<vmem>>, vector<1x8x1xf32>
    %100 = vector.shape_cast %99 : vector<1x8x1xf32> to vector<8x1xf32>
    %101 = vector.broadcast %100 : vector<8x1xf32> to vector<8x512xf32>
    %102 = arith.addf %98, %101 : vector<8x512xf32>
    %cst_22 = arith.constant 0.000000e+00 : f32
    %103 = vector.broadcast %cst_22 : f32 to vector<8x512xf32>
    %104 = arith.cmpf ogt, %102, %103 : vector<8x512xf32>
    %c0_23 = arith.constant 0 : index
    %c0_24 = arith.constant 0 : index
    %c0_25 = arith.constant 0 : index
    %105 = vector.load %arg6[%c0_23, %c0_24, %c0_25] : memref<2x8x1xf32, #tpu.memory_space<vmem>>, vector<1x8x1xf32>
    %106 = vector.shape_cast %105 : vector<1x8x1xf32> to vector<8x1xf32>
    %107 = vector.broadcast %106 : vector<8x1xf32> to vector<8x512xf32>
    %108 = arith.mulf %107, %102 : vector<8x512xf32>
    %109 = arith.select %104, %102, %108 : vector<8x512xi1>, vector<8x512xf32>
    %c0_26 = arith.constant 0 : index
    %c0_27 = arith.constant 0 : index
    %c0_28 = arith.constant 0 : index
    %110 = vector.load %arg7[%c0_26, %c0_27, %c0_28] : memref<2x4x8xf32, #tpu.memory_space<vmem>>, vector<1x4x8xf32>
    %111 = vector.shape_cast %110 : vector<1x4x8xf32> to vector<4x8xf32>
    %c0_29 = arith.constant 0 : index
    %c0_30 = arith.constant 0 : index
    %c0_31 = arith.constant 0 : index
    %112 = vector.load %arg8[%c0_29, %c0_30, %c0_31] : memref<2x4x1xf32, #tpu.memory_space<vmem>>, vector<1x4x1xf32>
    %113 = vector.shape_cast %112 : vector<1x4x1xf32> to vector<4x1xf32>
    %114 = vector.extract_strided_slice %111 {offsets = [0, 0], sizes = [4, 1], strides = [1, 1]} : vector<4x8xf32> to vector<4x1xf32>
    %115 = vector.extract_strided_slice %109 {offsets = [0, 0], sizes = [1, 512], strides = [1, 1]} : vector<8x512xf32> to vector<1x512xf32>
    %116 = vector.broadcast %114 : vector<4x1xf32> to vector<4x512xf32>
    %117 = vector.broadcast %115 : vector<1x512xf32> to vector<4x512xf32>
    %118 = arith.mulf %116, %117 : vector<4x512xf32>
    %119 = vector.broadcast %113 : vector<4x1xf32> to vector<4x512xf32>
    %120 = arith.addf %119, %118 : vector<4x512xf32>
    %121 = vector.extract_strided_slice %111 {offsets = [0, 1], sizes = [4, 1], strides = [1, 1]} : vector<4x8xf32> to vector<4x1xf32>
    %122 = vector.extract_strided_slice %109 {offsets = [1, 0], sizes = [1, 512], strides = [1, 1]} : vector<8x512xf32> to vector<1x512xf32>
    %123 = vector.broadcast %121 : vector<4x1xf32> to vector<4x512xf32>
    %124 = vector.broadcast %122 : vector<1x512xf32> to vector<4x512xf32>
    %125 = arith.mulf %123, %124 : vector<4x512xf32>
    %126 = arith.addf %120, %125 : vector<4x512xf32>
    %127 = vector.extract_strided_slice %111 {offsets = [0, 2], sizes = [4, 1], strides = [1, 1]} : vector<4x8xf32> to vector<4x1xf32>
    %128 = vector.extract_strided_slice %109 {offsets = [2, 0], sizes = [1, 512], strides = [1, 1]} : vector<8x512xf32> to vector<1x512xf32>
    %129 = vector.broadcast %127 : vector<4x1xf32> to vector<4x512xf32>
    %130 = vector.broadcast %128 : vector<1x512xf32> to vector<4x512xf32>
    %131 = arith.mulf %129, %130 : vector<4x512xf32>
    %132 = arith.addf %126, %131 : vector<4x512xf32>
    %133 = vector.extract_strided_slice %111 {offsets = [0, 3], sizes = [4, 1], strides = [1, 1]} : vector<4x8xf32> to vector<4x1xf32>
    %134 = vector.extract_strided_slice %109 {offsets = [3, 0], sizes = [1, 512], strides = [1, 1]} : vector<8x512xf32> to vector<1x512xf32>
    %135 = vector.broadcast %133 : vector<4x1xf32> to vector<4x512xf32>
    %136 = vector.broadcast %134 : vector<1x512xf32> to vector<4x512xf32>
    %137 = arith.mulf %135, %136 : vector<4x512xf32>
    %138 = arith.addf %132, %137 : vector<4x512xf32>
    %139 = vector.extract_strided_slice %111 {offsets = [0, 4], sizes = [4, 1], strides = [1, 1]} : vector<4x8xf32> to vector<4x1xf32>
    %140 = vector.extract_strided_slice %109 {offsets = [4, 0], sizes = [1, 512], strides = [1, 1]} : vector<8x512xf32> to vector<1x512xf32>
    %141 = vector.broadcast %139 : vector<4x1xf32> to vector<4x512xf32>
    %142 = vector.broadcast %140 : vector<1x512xf32> to vector<4x512xf32>
    %143 = arith.mulf %141, %142 : vector<4x512xf32>
    %144 = arith.addf %138, %143 : vector<4x512xf32>
    %145 = vector.extract_strided_slice %111 {offsets = [0, 5], sizes = [4, 1], strides = [1, 1]} : vector<4x8xf32> to vector<4x1xf32>
    %146 = vector.extract_strided_slice %109 {offsets = [5, 0], sizes = [1, 512], strides = [1, 1]} : vector<8x512xf32> to vector<1x512xf32>
    %147 = vector.broadcast %145 : vector<4x1xf32> to vector<4x512xf32>
    %148 = vector.broadcast %146 : vector<1x512xf32> to vector<4x512xf32>
    %149 = arith.mulf %147, %148 : vector<4x512xf32>
    %150 = arith.addf %144, %149 : vector<4x512xf32>
    %151 = vector.extract_strided_slice %111 {offsets = [0, 6], sizes = [4, 1], strides = [1, 1]} : vector<4x8xf32> to vector<4x1xf32>
    %152 = vector.extract_strided_slice %109 {offsets = [6, 0], sizes = [1, 512], strides = [1, 1]} : vector<8x512xf32> to vector<1x512xf32>
    %153 = vector.broadcast %151 : vector<4x1xf32> to vector<4x512xf32>
    %154 = vector.broadcast %152 : vector<1x512xf32> to vector<4x512xf32>
    %155 = arith.mulf %153, %154 : vector<4x512xf32>
    %156 = arith.addf %150, %155 : vector<4x512xf32>
    %157 = vector.extract_strided_slice %111 {offsets = [0, 7], sizes = [4, 1], strides = [1, 1]} : vector<4x8xf32> to vector<4x1xf32>
    %158 = vector.extract_strided_slice %109 {offsets = [7, 0], sizes = [1, 512], strides = [1, 1]} : vector<8x512xf32> to vector<1x512xf32>
    %159 = vector.broadcast %157 : vector<4x1xf32> to vector<4x512xf32>
    %160 = vector.broadcast %158 : vector<1x512xf32> to vector<4x512xf32>
    %161 = arith.mulf %159, %160 : vector<4x512xf32>
    %162 = arith.addf %156, %161 : vector<4x512xf32>
    %163 = arith.addf %0, %162 : vector<4x512xf32>
    %c1_32 = arith.constant 1 : index
    %c0_33 = arith.constant 0 : index
    %c0_34 = arith.constant 0 : index
    %164 = vector.load %arg1[%c1_32, %c0_33, %c0_34] : memref<2x8x4xf32, #tpu.memory_space<vmem>>, vector<1x8x4xf32>
    %165 = vector.shape_cast %164 : vector<1x8x4xf32> to vector<8x4xf32>
    %c1_35 = arith.constant 1 : index
    %c0_36 = arith.constant 0 : index
    %c0_37 = arith.constant 0 : index
    %166 = vector.load %arg2[%c1_35, %c0_36, %c0_37] : memref<2x8x1xf32, #tpu.memory_space<vmem>>, vector<1x8x1xf32>
    %167 = vector.shape_cast %166 : vector<1x8x1xf32> to vector<8x1xf32>
    %168 = vector.extract_strided_slice %165 {offsets = [0, 0], sizes = [8, 1], strides = [1, 1]} : vector<8x4xf32> to vector<8x1xf32>
    %169 = vector.extract_strided_slice %163 {offsets = [0, 0], sizes = [1, 512], strides = [1, 1]} : vector<4x512xf32> to vector<1x512xf32>
    %170 = vector.broadcast %168 : vector<8x1xf32> to vector<8x512xf32>
    %171 = vector.broadcast %169 : vector<1x512xf32> to vector<8x512xf32>
    %172 = arith.mulf %170, %171 : vector<8x512xf32>
    %173 = vector.broadcast %167 : vector<8x1xf32> to vector<8x512xf32>
    %174 = arith.addf %173, %172 : vector<8x512xf32>
    %175 = vector.extract_strided_slice %165 {offsets = [0, 1], sizes = [8, 1], strides = [1, 1]} : vector<8x4xf32> to vector<8x1xf32>
    %176 = vector.extract_strided_slice %163 {offsets = [1, 0], sizes = [1, 512], strides = [1, 1]} : vector<4x512xf32> to vector<1x512xf32>
    %177 = vector.broadcast %175 : vector<8x1xf32> to vector<8x512xf32>
    %178 = vector.broadcast %176 : vector<1x512xf32> to vector<8x512xf32>
    %179 = arith.mulf %177, %178 : vector<8x512xf32>
    %180 = arith.addf %174, %179 : vector<8x512xf32>
    %181 = vector.extract_strided_slice %165 {offsets = [0, 2], sizes = [8, 1], strides = [1, 1]} : vector<8x4xf32> to vector<8x1xf32>
    %182 = vector.extract_strided_slice %163 {offsets = [2, 0], sizes = [1, 512], strides = [1, 1]} : vector<4x512xf32> to vector<1x512xf32>
    %183 = vector.broadcast %181 : vector<8x1xf32> to vector<8x512xf32>
    %184 = vector.broadcast %182 : vector<1x512xf32> to vector<8x512xf32>
    %185 = arith.mulf %183, %184 : vector<8x512xf32>
    %186 = arith.addf %180, %185 : vector<8x512xf32>
    %187 = vector.extract_strided_slice %165 {offsets = [0, 3], sizes = [8, 1], strides = [1, 1]} : vector<8x4xf32> to vector<8x1xf32>
    %188 = vector.extract_strided_slice %163 {offsets = [3, 0], sizes = [1, 512], strides = [1, 1]} : vector<4x512xf32> to vector<1x512xf32>
    %189 = vector.broadcast %187 : vector<8x1xf32> to vector<8x512xf32>
    %190 = vector.broadcast %188 : vector<1x512xf32> to vector<8x512xf32>
    %191 = arith.mulf %189, %190 : vector<8x512xf32>
    %192 = arith.addf %186, %191 : vector<8x512xf32>
    %cst_38 = arith.constant 0.000000e+00 : f32
    %193 = vector.broadcast %cst_38 : f32 to vector<8x512xf32>
    %194 = arith.cmpf ogt, %192, %193 : vector<8x512xf32>
    %c1_39 = arith.constant 1 : index
    %c0_40 = arith.constant 0 : index
    %c0_41 = arith.constant 0 : index
    %195 = vector.load %arg3[%c1_39, %c0_40, %c0_41] : memref<2x8x1xf32, #tpu.memory_space<vmem>>, vector<1x8x1xf32>
    %196 = vector.shape_cast %195 : vector<1x8x1xf32> to vector<8x1xf32>
    %197 = vector.broadcast %196 : vector<8x1xf32> to vector<8x512xf32>
    %198 = arith.mulf %197, %192 : vector<8x512xf32>
    %199 = arith.select %194, %192, %198 : vector<8x512xi1>, vector<8x512xf32>
    %c1_42 = arith.constant 1 : index
    %c0_43 = arith.constant 0 : index
    %c0_44 = arith.constant 0 : index
    %c0_45 = arith.constant 0 : index
    %200 = vector.load %arg4[%c1_42, %c0_43, %c0_44, %c0_45] : memref<2x9x8x1xf32, #tpu.memory_space<vmem>>, vector<1x9x8x1xf32>
    %201 = vector.shape_cast %200 : vector<1x9x8x1xf32> to vector<9x8x1xf32>
    %c1_i32_46 = arith.constant 1 : i32
    %202 = tpu.dynamic_rotate %199 by %c1_i32_46 dim 1 : vector<8x512xf32>, i32 -> vector<8x512xf32>
    %c0_47 = arith.constant 0 : index
    %c0_48 = arith.constant 0 : index
    %203 = vector.load %arg9[%c0_47, %c0_48] : memref<4x512xf32, #tpu.memory_space<vmem>>, vector<1x512xf32>
    %204 = vector.broadcast %203 : vector<1x512xf32> to vector<8x512xf32>
    %205 = arith.mulf %202, %204 : vector<8x512xf32>
    %c511_i32_49 = arith.constant 511 : i32
    %206 = tpu.dynamic_rotate %199 by %c511_i32_49 dim 1 : vector<8x512xf32>, i32 -> vector<8x512xf32>
    %c1_50 = arith.constant 1 : index
    %c0_51 = arith.constant 0 : index
    %207 = vector.load %arg9[%c1_50, %c0_51] : memref<4x512xf32, #tpu.memory_space<vmem>>, vector<1x512xf32>
    %208 = vector.broadcast %207 : vector<1x512xf32> to vector<8x512xf32>
    %209 = arith.mulf %206, %208 : vector<8x512xf32>
    %210 = vector.extract_strided_slice %201 {offsets = [3, 0, 0], sizes = [1, 8, 1], strides = [1, 1, 1]} : vector<9x8x1xf32> to vector<1x8x1xf32>
    %211 = vector.shape_cast %210 : vector<1x8x1xf32> to vector<8x1xf32>
    %212 = vector.broadcast %211 : vector<8x1xf32> to vector<8x512xf32>
    %213 = arith.mulf %212, %205 : vector<8x512xf32>
    %214 = vector.extract_strided_slice %201 {offsets = [4, 0, 0], sizes = [1, 8, 1], strides = [1, 1, 1]} : vector<9x8x1xf32> to vector<1x8x1xf32>
    %215 = vector.shape_cast %214 : vector<1x8x1xf32> to vector<8x1xf32>
    %216 = vector.broadcast %215 : vector<8x1xf32> to vector<8x512xf32>
    %217 = arith.mulf %216, %199 : vector<8x512xf32>
    %218 = arith.addf %213, %217 : vector<8x512xf32>
    %219 = vector.extract_strided_slice %201 {offsets = [5, 0, 0], sizes = [1, 8, 1], strides = [1, 1, 1]} : vector<9x8x1xf32> to vector<1x8x1xf32>
    %220 = vector.shape_cast %219 : vector<1x8x1xf32> to vector<8x1xf32>
    %221 = vector.broadcast %220 : vector<8x1xf32> to vector<8x512xf32>
    %222 = arith.mulf %221, %209 : vector<8x512xf32>
    %223 = arith.addf %218, %222 : vector<8x512xf32>
    %224 = vector.extract_strided_slice %201 {offsets = [0, 0, 0], sizes = [1, 8, 1], strides = [1, 1, 1]} : vector<9x8x1xf32> to vector<1x8x1xf32>
    %225 = vector.shape_cast %224 : vector<1x8x1xf32> to vector<8x1xf32>
    %226 = vector.broadcast %225 : vector<8x1xf32> to vector<8x512xf32>
    %227 = arith.mulf %226, %205 : vector<8x512xf32>
    %228 = vector.extract_strided_slice %201 {offsets = [1, 0, 0], sizes = [1, 8, 1], strides = [1, 1, 1]} : vector<9x8x1xf32> to vector<1x8x1xf32>
    %229 = vector.shape_cast %228 : vector<1x8x1xf32> to vector<8x1xf32>
    %230 = vector.broadcast %229 : vector<8x1xf32> to vector<8x512xf32>
    %231 = arith.mulf %230, %199 : vector<8x512xf32>
    %232 = arith.addf %227, %231 : vector<8x512xf32>
    %233 = vector.extract_strided_slice %201 {offsets = [2, 0, 0], sizes = [1, 8, 1], strides = [1, 1, 1]} : vector<9x8x1xf32> to vector<1x8x1xf32>
    %234 = vector.shape_cast %233 : vector<1x8x1xf32> to vector<8x1xf32>
    %235 = vector.broadcast %234 : vector<8x1xf32> to vector<8x512xf32>
    %236 = arith.mulf %235, %209 : vector<8x512xf32>
    %237 = arith.addf %232, %236 : vector<8x512xf32>
    %c16_i32_52 = arith.constant 16 : i32
    %238 = tpu.dynamic_rotate %237 by %c16_i32_52 dim 1 : vector<8x512xf32>, i32 -> vector<8x512xf32>
    %c2_53 = arith.constant 2 : index
    %c0_54 = arith.constant 0 : index
    %239 = vector.load %arg9[%c2_53, %c0_54] : memref<4x512xf32, #tpu.memory_space<vmem>>, vector<1x512xf32>
    %240 = vector.broadcast %239 : vector<1x512xf32> to vector<8x512xf32>
    %241 = arith.mulf %238, %240 : vector<8x512xf32>
    %242 = arith.addf %223, %241 : vector<8x512xf32>
    %243 = vector.extract_strided_slice %201 {offsets = [6, 0, 0], sizes = [1, 8, 1], strides = [1, 1, 1]} : vector<9x8x1xf32> to vector<1x8x1xf32>
    %244 = vector.shape_cast %243 : vector<1x8x1xf32> to vector<8x1xf32>
    %245 = vector.broadcast %244 : vector<8x1xf32> to vector<8x512xf32>
    %246 = arith.mulf %245, %205 : vector<8x512xf32>
    %247 = vector.extract_strided_slice %201 {offsets = [7, 0, 0], sizes = [1, 8, 1], strides = [1, 1, 1]} : vector<9x8x1xf32> to vector<1x8x1xf32>
    %248 = vector.shape_cast %247 : vector<1x8x1xf32> to vector<8x1xf32>
    %249 = vector.broadcast %248 : vector<8x1xf32> to vector<8x512xf32>
    %250 = arith.mulf %249, %199 : vector<8x512xf32>
    %251 = arith.addf %246, %250 : vector<8x512xf32>
    %252 = vector.extract_strided_slice %201 {offsets = [8, 0, 0], sizes = [1, 8, 1], strides = [1, 1, 1]} : vector<9x8x1xf32> to vector<1x8x1xf32>
    %253 = vector.shape_cast %252 : vector<1x8x1xf32> to vector<8x1xf32>
    %254 = vector.broadcast %253 : vector<8x1xf32> to vector<8x512xf32>
    %255 = arith.mulf %254, %209 : vector<8x512xf32>
    %256 = arith.addf %251, %255 : vector<8x512xf32>
    %c496_i32_55 = arith.constant 496 : i32
    %257 = tpu.dynamic_rotate %256 by %c496_i32_55 dim 1 : vector<8x512xf32>, i32 -> vector<8x512xf32>
    %c3_56 = arith.constant 3 : index
    %c0_57 = arith.constant 0 : index
    %258 = vector.load %arg9[%c3_56, %c0_57] : memref<4x512xf32, #tpu.memory_space<vmem>>, vector<1x512xf32>
    %259 = vector.broadcast %258 : vector<1x512xf32> to vector<8x512xf32>
    %260 = arith.mulf %257, %259 : vector<8x512xf32>
    %261 = arith.addf %242, %260 : vector<8x512xf32>
    %c1_58 = arith.constant 1 : index
    %c0_59 = arith.constant 0 : index
    %c0_60 = arith.constant 0 : index
    %262 = vector.load %arg5[%c1_58, %c0_59, %c0_60] : memref<2x8x1xf32, #tpu.memory_space<vmem>>, vector<1x8x1xf32>
    %263 = vector.shape_cast %262 : vector<1x8x1xf32> to vector<8x1xf32>
    %264 = vector.broadcast %263 : vector<8x1xf32> to vector<8x512xf32>
    %265 = arith.addf %261, %264 : vector<8x512xf32>
    %cst_61 = arith.constant 0.000000e+00 : f32
    %266 = vector.broadcast %cst_61 : f32 to vector<8x512xf32>
    %267 = arith.cmpf ogt, %265, %266 : vector<8x512xf32>
    %c1_62 = arith.constant 1 : index
    %c0_63 = arith.constant 0 : index
    %c0_64 = arith.constant 0 : index
    %268 = vector.load %arg6[%c1_62, %c0_63, %c0_64] : memref<2x8x1xf32, #tpu.memory_space<vmem>>, vector<1x8x1xf32>
    %269 = vector.shape_cast %268 : vector<1x8x1xf32> to vector<8x1xf32>
    %270 = vector.broadcast %269 : vector<8x1xf32> to vector<8x512xf32>
    %271 = arith.mulf %270, %265 : vector<8x512xf32>
    %272 = arith.select %267, %265, %271 : vector<8x512xi1>, vector<8x512xf32>
    %c1_65 = arith.constant 1 : index
    %c0_66 = arith.constant 0 : index
    %c0_67 = arith.constant 0 : index
    %273 = vector.load %arg7[%c1_65, %c0_66, %c0_67] : memref<2x4x8xf32, #tpu.memory_space<vmem>>, vector<1x4x8xf32>
    %274 = vector.shape_cast %273 : vector<1x4x8xf32> to vector<4x8xf32>
    %c1_68 = arith.constant 1 : index
    %c0_69 = arith.constant 0 : index
    %c0_70 = arith.constant 0 : index
    %275 = vector.load %arg8[%c1_68, %c0_69, %c0_70] : memref<2x4x1xf32, #tpu.memory_space<vmem>>, vector<1x4x1xf32>
    %276 = vector.shape_cast %275 : vector<1x4x1xf32> to vector<4x1xf32>
    %277 = vector.extract_strided_slice %274 {offsets = [0, 0], sizes = [4, 1], strides = [1, 1]} : vector<4x8xf32> to vector<4x1xf32>
    %278 = vector.extract_strided_slice %272 {offsets = [0, 0], sizes = [1, 512], strides = [1, 1]} : vector<8x512xf32> to vector<1x512xf32>
    %279 = vector.broadcast %277 : vector<4x1xf32> to vector<4x512xf32>
    %280 = vector.broadcast %278 : vector<1x512xf32> to vector<4x512xf32>
    %281 = arith.mulf %279, %280 : vector<4x512xf32>
    %282 = vector.broadcast %276 : vector<4x1xf32> to vector<4x512xf32>
    %283 = arith.addf %282, %281 : vector<4x512xf32>
    %284 = vector.extract_strided_slice %274 {offsets = [0, 1], sizes = [4, 1], strides = [1, 1]} : vector<4x8xf32> to vector<4x1xf32>
    %285 = vector.extract_strided_slice %272 {offsets = [1, 0], sizes = [1, 512], strides = [1, 1]} : vector<8x512xf32> to vector<1x512xf32>
    %286 = vector.broadcast %284 : vector<4x1xf32> to vector<4x512xf32>
    %287 = vector.broadcast %285 : vector<1x512xf32> to vector<4x512xf32>
    %288 = arith.mulf %286, %287 : vector<4x512xf32>
    %289 = arith.addf %283, %288 : vector<4x512xf32>
    %290 = vector.extract_strided_slice %274 {offsets = [0, 2], sizes = [4, 1], strides = [1, 1]} : vector<4x8xf32> to vector<4x1xf32>
    %291 = vector.extract_strided_slice %272 {offsets = [2, 0], sizes = [1, 512], strides = [1, 1]} : vector<8x512xf32> to vector<1x512xf32>
    %292 = vector.broadcast %290 : vector<4x1xf32> to vector<4x512xf32>
    %293 = vector.broadcast %291 : vector<1x512xf32> to vector<4x512xf32>
    %294 = arith.mulf %292, %293 : vector<4x512xf32>
    %295 = arith.addf %289, %294 : vector<4x512xf32>
    %296 = vector.extract_strided_slice %274 {offsets = [0, 3], sizes = [4, 1], strides = [1, 1]} : vector<4x8xf32> to vector<4x1xf32>
    %297 = vector.extract_strided_slice %272 {offsets = [3, 0], sizes = [1, 512], strides = [1, 1]} : vector<8x512xf32> to vector<1x512xf32>
    %298 = vector.broadcast %296 : vector<4x1xf32> to vector<4x512xf32>
    %299 = vector.broadcast %297 : vector<1x512xf32> to vector<4x512xf32>
    %300 = arith.mulf %298, %299 : vector<4x512xf32>
    %301 = arith.addf %295, %300 : vector<4x512xf32>
    %302 = vector.extract_strided_slice %274 {offsets = [0, 4], sizes = [4, 1], strides = [1, 1]} : vector<4x8xf32> to vector<4x1xf32>
    %303 = vector.extract_strided_slice %272 {offsets = [4, 0], sizes = [1, 512], strides = [1, 1]} : vector<8x512xf32> to vector<1x512xf32>
    %304 = vector.broadcast %302 : vector<4x1xf32> to vector<4x512xf32>
    %305 = vector.broadcast %303 : vector<1x512xf32> to vector<4x512xf32>
    %306 = arith.mulf %304, %305 : vector<4x512xf32>
    %307 = arith.addf %301, %306 : vector<4x512xf32>
    %308 = vector.extract_strided_slice %274 {offsets = [0, 5], sizes = [4, 1], strides = [1, 1]} : vector<4x8xf32> to vector<4x1xf32>
    %309 = vector.extract_strided_slice %272 {offsets = [5, 0], sizes = [1, 512], strides = [1, 1]} : vector<8x512xf32> to vector<1x512xf32>
    %310 = vector.broadcast %308 : vector<4x1xf32> to vector<4x512xf32>
    %311 = vector.broadcast %309 : vector<1x512xf32> to vector<4x512xf32>
    %312 = arith.mulf %310, %311 : vector<4x512xf32>
    %313 = arith.addf %307, %312 : vector<4x512xf32>
    %314 = vector.extract_strided_slice %274 {offsets = [0, 6], sizes = [4, 1], strides = [1, 1]} : vector<4x8xf32> to vector<4x1xf32>
    %315 = vector.extract_strided_slice %272 {offsets = [6, 0], sizes = [1, 512], strides = [1, 1]} : vector<8x512xf32> to vector<1x512xf32>
    %316 = vector.broadcast %314 : vector<4x1xf32> to vector<4x512xf32>
    %317 = vector.broadcast %315 : vector<1x512xf32> to vector<4x512xf32>
    %318 = arith.mulf %316, %317 : vector<4x512xf32>
    %319 = arith.addf %313, %318 : vector<4x512xf32>
    %320 = vector.extract_strided_slice %274 {offsets = [0, 7], sizes = [4, 1], strides = [1, 1]} : vector<4x8xf32> to vector<4x1xf32>
    %321 = vector.extract_strided_slice %272 {offsets = [7, 0], sizes = [1, 512], strides = [1, 1]} : vector<8x512xf32> to vector<1x512xf32>
    %322 = vector.broadcast %320 : vector<4x1xf32> to vector<4x512xf32>
    %323 = vector.broadcast %321 : vector<1x512xf32> to vector<4x512xf32>
    %324 = arith.mulf %322, %323 : vector<4x512xf32>
    %325 = arith.addf %319, %324 : vector<4x512xf32>
    %326 = arith.addf %163, %325 : vector<4x512xf32>
    %c0_71 = arith.constant 0 : index
    %c0_72 = arith.constant 0 : index
    %327 = vector.load %arg10[%c0_71, %c0_72] : memref<4x512xf32, #tpu.memory_space<vmem>>, vector<4x512xf32>
    tpu.vector_store %arg10[%c0_71, %c0_72], %326 {strides = array<i32>} : memref<4x512xf32, #tpu.memory_space<vmem>>, vector<4x512xf32>,
    return
  }
}

</mosaic_0001>

<llo_original>
// kernel: residual_forward.1
$region0: #{residual_forward.1}
  #allocation0 [shape = 'u32[]', space=smem, size = 0x4, offset = 0x4, fixed_abs, tag = 'smem constant byte address 0x4 - core index']
  #allocation1 [shape = 'u32[144,128]{1,0:T(1,128)}', space=vmem, size = 0x12000, scoped, tag = 'internal scratch']
  %s0 = inlined_call_operand.hbm [shape: f32[4,512], index: 0, kind: input, shape index: {}, may-alias: {0,10}]
  %s1 = inlined_call_operand.vmem [shape: f32[2,8,4], index: 1, kind: input, shape index: {}]
  %s2 = inlined_call_operand.vmem [shape: f32[2,8,1], index: 2, kind: input, shape index: {}]
  %s3 = inlined_call_operand.vmem [shape: f32[2,8,1], index: 3, kind: input, shape index: {}]
  %s4 = inlined_call_operand.vmem [shape: f32[2,9,8,1], index: 4, kind: input, shape index: {}]
  %s5 = inlined_call_operand.vmem [shape: f32[2,8,1], index: 5, kind: input, shape index: {}]
  %s6 = inlined_call_operand.vmem [shape: f32[2,8,1], index: 6, kind: input, shape index: {}]
  %s7 = inlined_call_operand.vmem [shape: f32[2,4,8], index: 7, kind: input, shape index: {}]
  %s8 = inlined_call_operand.vmem [shape: f32[2,4,1], index: 8, kind: input, shape index: {}]
  %s9 = inlined_call_operand.vmem [shape: f32[4,512], index: 9, kind: input, shape index: {}]
  %s10 = inlined_call_operand.hbm [shape: f32[4,512], index: 10, kind: output, shape index: {}, may-alias: {0,10}]
  %s11 = sld [smem:[#allocation0]]
  $region54: #{residual_forward.1} parent=0
    _
  %s13 = ssub.s32 1, %s11
  %s14 = scalar_select 0, %s13, %s11
  $region1: #{residual_forward.1} parent=0
    #allocation2 [shape = 'u8[8192]{0}', space=vmem, size = 0x2000, scoped, tag = 'input window, operand 0, single buffered']
    #allocation3 [shape = 's32[1]{0}', space=sflag, size = 0x4, scoped, tag = 'scoped memory for residual_forward.1']
    #allocation4 [shape = 's32[1]{0}', space=sflag, size = 0x4, scoped, tag = 'scoped memory for residual_forward.1']
    #allocation5 [shape = 'u8[8192]{0}', space=vmem, size = 0x2000, scoped, tag = 'output window, operand 0, single buffered']
    %15 = vsyncpa [#allocation3], 0
    %16 = vsyncpa [#allocation4], 0
    // Predicated region
    $region2: #{residual_forward.1} parent=1 // pred_check
      _
    $region3: #{residual_forward.1} parent=1 // pred_check_branch
      %18 = sbr.rel (0) target = $region5
    $region4: #{residual_forward.1} parent=1 // pred_region
      %s20 = ssub.s32 256, 256
      %21 = vsyncadd [#allocation3], %s20
      %s23 = sshll.u32 [#allocation2], 4
      %s24 = int_to_ptr.vmem [resolvable:$true] %s23
      %26 = dma.hbm_to_vmem [thread:$0]  %s0, 256, %s24, [#allocation3]
    $region5: #{residual_forward.1} parent=1 // pred_fallthru
      _
    // Predicated region
    $region6: #{residual_forward.1} parent=1 // pred_check
      _
    $region7: #{residual_forward.1} parent=1 // pred_check_branch
      %28 = sbr.rel (0) target = $region9
    $region8: #{residual_forward.1} parent=1 // pred_region
      _
    $region9: #{residual_forward.1} parent=1 // pred_fallthru
      _
    // Predicated region
    $region10: #{residual_forward.1} parent=1 // pred_check
      _
    $region11: #{residual_forward.1} parent=1 // pred_check_branch
      %30 = sbr.rel (0) target = $region13
    $region12: #{residual_forward.1} parent=1 // pred_region
      _
    $region13: #{residual_forward.1} parent=1 // pred_fallthru
      _
    // Predicated region
    $region14: #{residual_forward.1} parent=1 // pred_check
      _
    $region15: #{residual_forward.1} parent=1 // pred_check_branch
      %32 = sbr.rel (0) target = $region17
    $region16: #{residual_forward.1} parent=1 // pred_region
      _
    $region17: #{residual_forward.1} parent=1 // pred_fallthru
      _
    // Predicated region
    $region18: #{residual_forward.1} parent=1 // pred_check
      _
    $region19: #{residual_forward.1} parent=1 // pred_check_branch
      %34 = sbr.rel (0) target = $region21
    $region20: #{residual_forward.1} parent=1 // pred_region
      _
    $region21: #{residual_forward.1} parent=1 // pred_fallthru
      _
    // Predicated region
    $region22: #{residual_forward.1} parent=1 // pred_check
      _
    $region23: #{residual_forward.1} parent=1 // pred_check_branch
      %36 = sbr.rel (0) target = $region25
    $region24: #{residual_forward.1} parent=1 // pred_region
      _
    $region25: #{residual_forward.1} parent=1 // pred_fallthru
      _
    // Predicated region
    $region26: #{residual_forward.1} parent=1 // pred_check
      _
    $region27: #{residual_forward.1} parent=1 // pred_check_branch
      %38 = sbr.rel (0) target = $region29
    $region28: #{residual_forward.1} parent=1 // pred_region
      _
    $region29: #{residual_forward.1} parent=1 // pred_fallthru
      _
    // Predicated region
    $region30: #{residual_forward.1} parent=1 // pred_check
      _
    $region31: #{residual_forward.1} parent=1 // pred_check_branch
      %40 = sbr.rel (0) target = $region33
    $region32: #{residual_forward.1} parent=1 // pred_region
      _
    $region33: #{residual_forward.1} parent=1 // pred_fallthru
      _
    // Predicated region
    $region34: #{residual_forward.1} parent=1 // pred_check
      _
    $region35: #{residual_forward.1} parent=1 // pred_check_branch
      %42 = sbr.rel (0) target = $region37
    $region36: #{residual_forward.1} parent=1 // pred_region
      _
    $region37: #{residual_forward.1} parent=1 // pred_fallthru
      _
    // Predicated region
    $region38: #{residual_forward.1} parent=1 // pred_check
      _
    $region39: #{residual_forward.1} parent=1 // pred_check_branch
      %44 = sbr.rel (0) target = $region41
    $region40: #{residual_forward.1} parent=1 // pred_region
      _
    $region41: #{residual_forward.1} parent=1 // pred_fallthru
      _
    // Predicated region
    $region42: #{residual_forward.1} parent=1 // pred_check
      _
    $region43: #{residual_forward.1} parent=1 // pred_check_branch
      %46 = sbr.rel (0) target = $region45
    $region44: #{residual_forward.1} parent=1 // pred_region
      %47 = dma.done [#allocation3], 256
    $region45: #{residual_forward.1} parent=1 // pred_fallthru
      _
    %v48 = vld [vmem:[#allocation2] sm:$0xff]
    %v49 = vld [vmem:[#allocation2 + $0x8] sm:$0xff]
    %v50 = vld [vmem:[%s1] sm:$0xff]
    %v51 = vld [vmem:[%s2] sm:$0xff]
    %53 = vset.pattern.permute.xlu0 0
    %54 = vperm.xlu0 %53, %v50
    %v55 = vpop.permute.xlu0 %54
    %v59 = vlaneseq
    %v60 = vshrl.u32 %v59, 7
    %v61 = vsub.s32 0, %v60
    %v62 = vrot.slane %v48, %v61
    %v63 = vlaneseq
    %v64 = vshrl.u32 %v63, 7
    %v65 = vsub.s32 4, %v64
    %v66 = vrot.slane %v48, %v65
    %v67 = vlaneseq
    %v68 = vshrl.u32 %v67, 7
    %v69 = vsub.s32 0, %v68
    %v70 = vrot.slane %v49, %v69
    %v71 = vlaneseq
    %v72 = vshrl.u32 %v71, 7
    %v73 = vsub.s32 4, %v72
    %v74 = vrot.slane %v49, %v73
    %v79 = vlaneseq
    %v80 = vshrl.u32 %v79, 7
    %v81 = vsub.s32 0, %v80
    %v82 = vrot.slane %v62, %v81
    %v83 = vlaneseq
    %v84 = vshrl.u32 %v83, 7
    %v85 = vsub.s32 0, %v84
    %v86 = vrot.slane %v66, %v85
    %v87 = vlaneseq
    %v88 = vshrl.u32 %v87, 7
    %v89 = vsub.s32 0, %v88
    %v90 = vrot.slane %v70, %v89
    %v91 = vlaneseq
    %v92 = vshrl.u32 %v91, 7
    %v93 = vsub.s32 0, %v92
    %v94 = vrot.slane %v74, %v93
    %v95 = vmul.f32 %v55, %v82
    %v96 = vmul.f32 %v55, %v86
    %v97 = vmul.f32 %v55, %v90
    %v98 = vmul.f32 %v55, %v94
    %100 = vset.pattern.permute.xlu0 0
    %101 = vperm.xlu0 %100, %v51
    %v102 = vpop.permute.xlu0 %101
    %v104 = vadd.f32 %v102, %v95
    %v105 = vadd.f32 %v102, %v96
    %v106 = vadd.f32 %v102, %v97
    %v107 = vadd.f32 %v102, %v98
    %108 = vset.pattern.permute.xlu0 1
    %109 = vperm.xlu0 %108, %v50
    %v110 = vpop.permute.xlu0 %109
    %v112 = vlaneseq
    %v113 = vshrl.u32 %v112, 7
    %v114 = vsub.s32 1, %v113
    %v115 = vrot.slane %v48, %v114
    %v116 = vlaneseq
    %v117 = vshrl.u32 %v116, 7
    %v118 = vsub.s32 5, %v117
    %v119 = vrot.slane %v48, %v118
    %v120 = vlaneseq
    %v121 = vshrl.u32 %v120, 7
    %v122 = vsub.s32 1, %v121
    %v123 = vrot.slane %v49, %v122
    %v124 = vlaneseq
    %v125 = vshrl.u32 %v124, 7
    %v126 = vsub.s32 5, %v125
    %v127 = vrot.slane %v49, %v126
    %v132 = vlaneseq
    %v133 = vshrl.u32 %v132, 7
    %v134 = vsub.s32 1, %v133
    %v135 = vrot.slane %v115, %v134
    %v136 = vlaneseq
    %v137 = vshrl.u32 %v136, 7
    %v138 = vsub.s32 1, %v137
    %v139 = vrot.slane %v119, %v138
    %v140 = vlaneseq
    %v141 = vshrl.u32 %v140, 7
    %v142 = vsub.s32 1, %v141
    %v143 = vrot.slane %v123, %v142
    %v144 = vlaneseq
    %v145 = vshrl.u32 %v144, 7
    %v146 = vsub.s32 1, %v145
    %v147 = vrot.slane %v127, %v146
    %v148 = vmul.f32 %v110, %v135
    %v149 = vmul.f32 %v110, %v139
    %v150 = vmul.f32 %v110, %v143
    %v151 = vmul.f32 %v110, %v147
    %v152 = vadd.f32 %v104, %v148
    %v153 = vadd.f32 %v105, %v149
    %v154 = vadd.f32 %v106, %v150
    %v155 = vadd.f32 %v107, %v151
    %156 = vset.pattern.permute.xlu0 2
    %157 = vperm.xlu0 %156, %v50
    %v158 = vpop.permute.xlu0 %157
    %v160 = vlaneseq
    %v161 = vshrl.u32 %v160, 7
    %v162 = vsub.s32 2, %v161
    %v163 = vrot.slane %v48, %v162
    %v164 = vlaneseq
    %v165 = vshrl.u32 %v164, 7
    %v166 = vsub.s32 6, %v165
    %v167 = vrot.slane %v48, %v166
    %v168 = vlaneseq
    %v169 = vshrl.u32 %v168, 7
    %v170 = vsub.s32 2, %v169
    %v171 = vrot.slane %v49, %v170
    %v172 = vlaneseq
    %v173 = vshrl.u32 %v172, 7
    %v174 = vsub.s32 6, %v173
    %v175 = vrot.slane %v49, %v174
    %v180 = vlaneseq
    %v181 = vshrl.u32 %v180, 7
    %v182 = vsub.s32 2, %v181
    %v183 = vrot.slane %v163, %v182
    %v184 = vlaneseq
    %v185 = vshrl.u32 %v184, 7
    %v186 = vsub.s32 2, %v185
    %v187 = vrot.slane %v167, %v186
    %v188 = vlaneseq
    %v189 = vshrl.u32 %v188, 7
    %v190 = vsub.s32 2, %v189
    %v191 = vrot.slane %v171, %v190
    %v192 = vlaneseq
    %v193 = vshrl.u32 %v192, 7
    %v194 = vsub.s32 2, %v193
    %v195 = vrot.slane %v175, %v194
    %v196 = vmul.f32 %v158, %v183
    %v197 = vmul.f32 %v158, %v187
    %v198 = vmul.f32 %v158, %v191
    %v199 = vmul.f32 %v158, %v195
    %v200 = vadd.f32 %v152, %v196
    %v201 = vadd.f32 %v153, %v197
    %v202 = vadd.f32 %v154, %v198
    %v203 = vadd.f32 %v155, %v199
    %204 = vset.pattern.permute.xlu0 3
    %205 = vperm.xlu0 %204, %v50
    %v206 = vpop.permute.xlu0 %205
    %v208 = vlaneseq
    %v209 = vshrl.u32 %v208, 7
    %v210 = vsub.s32 3, %v209
    %v211 = vrot.slane %v48, %v210
    %v212 = vlaneseq
    %v213 = vshrl.u32 %v212, 7
    %v214 = vsub.s32 7, %v213
    %v215 = vrot.slane %v48, %v214
    %v216 = vlaneseq
    %v217 = vshrl.u32 %v216, 7
    %v218 = vsub.s32 3, %v217
    %v219 = vrot.slane %v49, %v218
    %v220 = vlaneseq
    %v221 = vshrl.u32 %v220, 7
    %v222 = vsub.s32 7, %v221
    %v223 = vrot.slane %v49, %v222
    %v228 = vlaneseq
    %v229 = vshrl.u32 %v228, 7
    %v230 = vsub.s32 3, %v229
    %v231 = vrot.slane %v211, %v230
    %v232 = vlaneseq
    %v233 = vshrl.u32 %v232, 7
    %v234 = vsub.s32 3, %v233
    %v235 = vrot.slane %v215, %v234
    %v236 = vlaneseq
    %v237 = vshrl.u32 %v236, 7
    %v238 = vsub.s32 3, %v237
    %v239 = vrot.slane %v219, %v238
    %v240 = vlaneseq
    %v241 = vshrl.u32 %v240, 7
    %v242 = vsub.s32 3, %v241
    %v243 = vrot.slane %v223, %v242
    %v244 = vmul.f32 %v206, %v231
    %v245 = vmul.f32 %v206, %v235
    %v246 = vmul.f32 %v206, %v239
    %v247 = vmul.f32 %v206, %v243
    %v248 = vadd.f32 %v200, %v244
    %v249 = vadd.f32 %v201, %v245
    %v250 = vadd.f32 %v202, %v246
    %v251 = vadd.f32 %v203, %v247
    %vm252 = vcmp.gt.f32.partialorder %v248, 0.0
    %vm253 = vcmp.gt.f32.partialorder %v249, 0.0
    %vm254 = vcmp.gt.f32.partialorder %v250, 0.0
    %vm255 = vcmp.gt.f32.partialorder %v251, 0.0
    %v256 = vld [vmem:[%s3] sm:$0xff]
    %258 = vset.pattern.permute.xlu0 0
    %259 = vperm.xlu0 %258, %v256
    %v260 = vpop.permute.xlu0 %259
    %v262 = vmul.f32 %v260, %v248
    %v263 = vmul.f32 %v260, %v249
    %v264 = vmul.f32 %v260, %v250
    %v265 = vmul.f32 %v260, %v251
    %v266 = vsel %vm252, %v248, %v262
    %v267 = vsel %vm253, %v249, %v263
    %v268 = vsel %vm254, %v250, %v264
    %v269 = vsel %vm255, %v251, %v265
    %v270 = vld [vmem:[%s4] sm:$0xff]
    %v271 = vld [vmem:[%s4 + $0x8] sm:$0xff]
    %v272 = vld [vmem:[%s4 + $0x10] sm:$0xff]
    %v273 = vld [vmem:[%s4 + $0x18] sm:$0xff]
    %v274 = vld [vmem:[%s4 + $0x20] sm:$0xff]
    %v275 = vld [vmem:[%s4 + $0x28] sm:$0xff]
    %v276 = vld [vmem:[%s4 + $0x30] sm:$0xff]
    %v277 = vld [vmem:[%s4 + $0x38] sm:$0xff]
    %v278 = vld [vmem:[%s4 + $0x40] sm:$0xff]
    %279 = vrot.lane.b32.xlu0 %v266, 1
    %v280 = vpop.permute.xlu0 %279
    %281 = vrot.lane.b32.xlu0 %v267, 1
    %v282 = vpop.permute.xlu0 %281
    %283 = vrot.lane.b32.xlu0 %v268, 1
    %v284 = vpop.permute.xlu0 %283
    %285 = vrot.lane.b32.xlu0 %v269, 1
    %v286 = vpop.permute.xlu0 %285
    %v287 = vlaneseq
    %v288 = vand.u32 %v287, 127
    %vm289 = vcmp.lt.s32.totalorder %v288, 1
    %v290 = vsel %vm289, %v284, %v286
    %v291 = vsel %vm289, %v282, %v284
    %v292 = vsel %vm289, %v280, %v282
    %v293 = vsel %vm289, %v286, %v280
    %v294 = vld [vmem:[%s9] ss:$4 sm:$0xf]
    %v296 = vlaneseq
    %v297 = vshrl.u32 %v296, 7
    %v298 = vsub.s32 0, %v297
    %v299 = vrot.slane %v294, %v298
    %v300 = vlaneseq
    %v301 = vshrl.u32 %v300, 7
    %v302 = vsub.s32 1, %v301
    %v303 = vrot.slane %v294, %v302
    %v304 = vlaneseq
    %v305 = vshrl.u32 %v304, 7
    %v306 = vsub.s32 2, %v305
    %v307 = vrot.slane %v294, %v306
    %v308 = vlaneseq
    %v309 = vshrl.u32 %v308, 7
    %v310 = vsub.s32 3, %v309
    %v311 = vrot.slane %v294, %v310
    %v316 = vmul.f32 %v293, %v299
    %v317 = vmul.f32 %v292, %v303
    %v318 = vmul.f32 %v291, %v307
    %v319 = vmul.f32 %v290, %v311
    %320 = vrot.lane.b32.xlu0 %v266, 127
    %v321 = vpop.permute.xlu0 %320
    %322 = vrot.lane.b32.xlu0 %v267, 127
    %v323 = vpop.permute.xlu0 %322
    %324 = vrot.lane.b32.xlu0 %v268, 127
    %v325 = vpop.permute.xlu0 %324
    %326 = vrot.lane.b32.xlu0 %v269, 127
    %v327 = vpop.permute.xlu0 %326
    %vm328 = vcmp.lt.s32.totalorder %v288, 127
    %v329 = vsel %vm328, %v325, %v327
    %v330 = vsel %vm328, %v323, %v325
    %v331 = vsel %vm328, %v321, %v323
    %v332 = vsel %vm328, %v327, %v321
    %s333 = scalar_lea.vmem %s9, 1
    %v334 = vld [vmem:[%s333] ss:$4 sm:$0xf]
    %v336 = vlaneseq
    %v337 = vshrl.u32 %v336, 7
    %v338 = vsub.s32 0, %v337
    %v339 = vrot.slane %v334, %v338
    %v340 = vlaneseq
    %v341 = vshrl.u32 %v340, 7
    %v342 = vsub.s32 1, %v341
    %v343 = vrot.slane %v334, %v342
    %v344 = vlaneseq
    %v345 = vshrl.u32 %v344, 7
    %v346 = vsub.s32 2, %v345
    %v347 = vrot.slane %v334, %v346
    %v348 = vlaneseq
    %v349 = vshrl.u32 %v348, 7
    %v350 = vsub.s32 3, %v349
    %v351 = vrot.slane %v334, %v350
    %v356 = vmul.f32 %v331, %v339
    %v357 = vmul.f32 %v330, %v343
    %v358 = vmul.f32 %v329, %v347
    %v359 = vmul.f32 %v332, %v351
    %361 = vset.pattern.permute.xlu0 0
    %362 = vperm.xlu0 %361, %v273
    %v363 = vpop.permute.xlu0 %362
    %v365 = vmul.f32 %v363, %v316
    %v366 = vmul.f32 %v363, %v317
    %v367 = vmul.f32 %v363, %v318
    %v368 = vmul.f32 %v363, %v319
    %370 = vset.pattern.permute.xlu0 0
    %371 = vperm.xlu0 %370, %v274
    %v372 = vpop.permute.xlu0 %371
    %v374 = vmul.f32 %v372, %v266
    %v375 = vmul.f32 %v372, %v267
    %v376 = vmul.f32 %v372, %v268
    %v377 = vmul.f32 %v372, %v269
    %v378 = vadd.f32 %v365, %v374
    %v379 = vadd.f32 %v366, %v375
    %v380 = vadd.f32 %v367, %v376
    %v381 = vadd.f32 %v368, %v377
    %383 = vset.pattern.permute.xlu0 0
    %384 = vperm.xlu0 %383, %v275
    %v385 = vpop.permute.xlu0 %384
    %v387 = vmul.f32 %v385, %v356
    %v388 = vmul.f32 %v385, %v357
    %v389 = vmul.f32 %v385, %v358
    %v390 = vmul.f32 %v385, %v359
    %v391 = vadd.f32 %v378, %v387
    %v392 = vadd.f32 %v379, %v388
    %v393 = vadd.f32 %v380, %v389
    %v394 = vadd.f32 %v381, %v390
    %396 = vset.pattern.permute.xlu0 0
    %397 = vperm.xlu0 %396, %v270
    %v398 = vpop.permute.xlu0 %397
    %v400 = vmul.f32 %v398, %v316
    %v401 = vmul.f32 %v398, %v317
    %v402 = vmul.f32 %v398, %v318
    %v403 = vmul.f32 %v398, %v319
    %405 = vset.pattern.permute.xlu0 0
    %406 = vperm.xlu0 %405, %v271
    %v407 = vpop.permute.xlu0 %406
    %v409 = vmul.f32 %v407, %v266
    %v410 = vmul.f32 %v407, %v267
    %v411 = vmul.f32 %v407, %v268
    %v412 = vmul.f32 %v407, %v269
    %v413 = vadd.f32 %v400, %v409
    %v414 = vadd.f32 %v401, %v410
    %v415 = vadd.f32 %v402, %v411
    %v416 = vadd.f32 %v403, %v412
    %418 = vset.pattern.permute.xlu0 0
    %419 = vperm.xlu0 %418, %v272
    %v420 = vpop.permute.xlu0 %419
    %v422 = vmul.f32 %v420, %v356
    %v423 = vmul.f32 %v420, %v357
    %v424 = vmul.f32 %v420, %v358
    %v425 = vmul.f32 %v420, %v359
    %v426 = vadd.f32 %v413, %v422
    %v427 = vadd.f32 %v414, %v423
    %v428 = vadd.f32 %v415, %v424
    %v429 = vadd.f32 %v416, %v425
    %430 = vrot.lane.b32.xlu0 %v426, 16
    %v431 = vpop.permute.xlu0 %430
    %432 = vrot.lane.b32.xlu0 %v427, 16
    %v433 = vpop.permute.xlu0 %432
    %434 = vrot.lane.b32.xlu0 %v428, 16
    %v435 = vpop.permute.xlu0 %434
    %436 = vrot.lane.b32.xlu0 %v429, 16
    %v437 = vpop.permute.xlu0 %436
    %vm438 = vcmp.lt.s32.totalorder %v288, 16
    %v439 = vsel %vm438, %v435, %v437
    %v440 = vsel %vm438, %v433, %v435
    %v441 = vsel %vm438, %v431, %v433
    %v442 = vsel %vm438, %v437, %v431
    %s443 = scalar_lea.vmem %s9, 2
    %v444 = vld [vmem:[%s443] ss:$4 sm:$0xf]
    %v446 = vlaneseq
    %v447 = vshrl.u32 %v446, 7
    %v448 = vsub.s32 0, %v447
    %v449 = vrot.slane %v444, %v448
    %v450 = vlaneseq
    %v451 = vshrl.u32 %v450, 7
    %v452 = vsub.s32 1, %v451
    %v453 = vrot.slane %v444, %v452
    %v454 = vlaneseq
    %v455 = vshrl.u32 %v454, 7
    %v456 = vsub.s32 2, %v455
    %v457 = vrot.slane %v444, %v456
    %v458 = vlaneseq
    %v459 = vshrl.u32 %v458, 7
    %v460 = vsub.s32 3, %v459
    %v461 = vrot.slane %v444, %v460
    %v466 = vmul.f32 %v442, %v449
    %v467 = vmul.f32 %v441, %v453
    %v468 = vmul.f32 %v440, %v457
    %v469 = vmul.f32 %v439, %v461
    %v470 = vadd.f32 %v391, %v466
    %v471 = vadd.f32 %v392, %v467
    %v472 = vadd.f32 %v393, %v468
    %v473 = vadd.f32 %v394, %v469
    %475 = vset.pattern.permute.xlu0 0
    %476 = vperm.xlu0 %475, %v276
    %v477 = vpop.permute.xlu0 %476
    %v479 = vmul.f32 %v477, %v316
    %v480 = vmul.f32 %v477, %v317
    %v481 = vmul.f32 %v477, %v318
    %v482 = vmul.f32 %v477, %v319
    %484 = vset.pattern.permute.xlu0 0
    %485 = vperm.xlu0 %484, %v277
    %v486 = vpop.permute.xlu0 %485
    %v488 = vmul.f32 %v486, %v266
    %v489 = vmul.f32 %v486, %v267
    %v490 = vmul.f32 %v486, %v268
    %v491 = vmul.f32 %v486, %v269
    %v492 = vadd.f32 %v479, %v488
    %v493 = vadd.f32 %v480, %v489
    %v494 = vadd.f32 %v481, %v490
    %v495 = vadd.f32 %v482, %v491
    %497 = vset.pattern.permute.xlu0 0
    %498 = vperm.xlu0 %497, %v278
    %v499 = vpop.permute.xlu0 %498
    %v501 = vmul.f32 %v499, %v356
    %v502 = vmul.f32 %v499, %v357
    %v503 = vmul.f32 %v499, %v358
    %v504 = vmul.f32 %v499, %v359
    %v505 = vadd.f32 %v492, %v501
    %v506 = vadd.f32 %v493, %v502
    %v507 = vadd.f32 %v494, %v503
    %v508 = vadd.f32 %v495, %v504
    %509 = vrot.lane.b32.xlu0 %v505, 112
    %v510 = vpop.permute.xlu0 %509
    %511 = vrot.lane.b32.xlu0 %v506, 112
    %v512 = vpop.permute.xlu0 %511
    %513 = vrot.lane.b32.xlu0 %v507, 112
    %v514 = vpop.permute.xlu0 %513
    %515 = vrot.lane.b32.xlu0 %v508, 112
    %v516 = vpop.permute.xlu0 %515
    %vm517 = vcmp.lt.s32.totalorder %v288, 112
    %v518 = vsel %vm517, %v514, %v516
    %v519 = vsel %vm517, %v512, %v514
    %v520 = vsel %vm517, %v510, %v512
    %v521 = vsel %vm517, %v516, %v510
    %s522 = scalar_lea.vmem %s9, 3
    %v523 = vld [vmem:[%s522] ss:$4 sm:$0xf]
    %v525 = vlaneseq
    %v526 = vshrl.u32 %v525, 7
    %v527 = vsub.s32 0, %v526
    %v528 = vrot.slane %v523, %v527
    %v529 = vlaneseq
    %v530 = vshrl.u32 %v529, 7
    %v531 = vsub.s32 1, %v530
    %v532 = vrot.slane %v523, %v531
    %v533 = vlaneseq
    %v534 = vshrl.u32 %v533, 7
    %v535 = vsub.s32 2, %v534
    %v536 = vrot.slane %v523, %v535
    %v537 = vlaneseq
    %v538 = vshrl.u32 %v537, 7
    %v539 = vsub.s32 3, %v538
    %v540 = vrot.slane %v523, %v539
    %v545 = vmul.f32 %v520, %v528
    %v546 = vmul.f32 %v519, %v532
    %v547 = vmul.f32 %v518, %v536
    %v548 = vmul.f32 %v521, %v540
    %v549 = vadd.f32 %v470, %v545
    %v550 = vadd.f32 %v471, %v546
    %v551 = vadd.f32 %v472, %v547
    %v552 = vadd.f32 %v473, %v548
    %v553 = vld [vmem:[%s5] sm:$0xff]
    %555 = vset.pattern.permute.xlu0 0
    %556 = vperm.xlu0 %555, %v553
    %v557 = vpop.permute.xlu0 %556
    %v559 = vadd.f32 %v549, %v557
    %v560 = vadd.f32 %v550, %v557
    %v561 = vadd.f32 %v551, %v557
    %v562 = vadd.f32 %v552, %v557
    %vm563 = vcmp.gt.f32.partialorder %v559, 0.0
    %vm564 = vcmp.gt.f32.partialorder %v560, 0.0
    %vm565 = vcmp.gt.f32.partialorder %v561, 0.0
    %vm566 = vcmp.gt.f32.partialorder %v562, 0.0
    %v567 = vld [vmem:[%s6] sm:$0xff]
    %569 = vset.pattern.permute.xlu0 0
    %570 = vperm.xlu0 %569, %v567
    %v571 = vpop.permute.xlu0 %570
    %v573 = vmul.f32 %v571, %v559
    %v574 = vmul.f32 %v571, %v560
    %v575 = vmul.f32 %v571, %v561
    %v576 = vmul.f32 %v571, %v562
    %v577 = vsel %vm563, %v559, %v573
    %v578 = vsel %vm564, %v560, %v574
    %v579 = vsel %vm565, %v561, %v575
    %v580 = vsel %vm566, %v562, %v576
    %v581 = vld [vmem:[%s7] sm:$0xf]
    %v582 = vld [vmem:[%s8] sm:$0xf]
    %584 = vset.pattern.permute.xlu0 0
    %585 = vperm.xlu0 %584, %v581
    %v586 = vpop.permute.xlu0 %585
    %v588 = vlaneseq
    %v589 = vshrl.u32 %v588, 7
    %v590 = vsub.s32 0, %v589
    %v591 = vrot.slane %v577, %v590
    %v592 = vlaneseq
    %v593 = vshrl.u32 %v592, 7
    %v594 = vsub.s32 0, %v593
    %v595 = vrot.slane %v578, %v594
    %v596 = vlaneseq
    %v597 = vshrl.u32 %v596, 7
    %v598 = vsub.s32 0, %v597
    %v599 = vrot.slane %v579, %v598
    %v600 = vlaneseq
    %v601 = vshrl.u32 %v600, 7
    %v602 = vsub.s32 0, %v601
    %v603 = vrot.slane %v580, %v602
    %v604 = vmul.f32 %v586, %v591
    %v605 = vmul.f32 %v586, %v595
    %v606 = vmul.f32 %v586, %v599
    %v607 = vmul.f32 %v586, %v603
    %609 = vset.pattern.permute.xlu0 0
    %610 = vperm.xlu0 %609, %v582
    %v611 = vpop.permute.xlu0 %610
    %v613 = vadd.f32 %v611, %v604
    %v614 = vadd.f32 %v611, %v605
    %v615 = vadd.f32 %v611, %v606
    %v616 = vadd.f32 %v611, %v607
    %617 = vset.pattern.permute.xlu0 1
    %618 = vperm.xlu0 %617, %v581
    %v619 = vpop.permute.xlu0 %618
    %v621 = vlaneseq
    %v622 = vshrl.u32 %v621, 7
    %v623 = vsub.s32 1, %v622
    %v624 = vrot.slane %v577, %v623
    %v625 = vlaneseq
    %v626 = vshrl.u32 %v625, 7
    %v627 = vsub.s32 1, %v626
    %v628 = vrot.slane %v578, %v627
    %v629 = vlaneseq
    %v630 = vshrl.u32 %v629, 7
    %v631 = vsub.s32 1, %v630
    %v632 = vrot.slane %v579, %v631
    %v633 = vlaneseq
    %v634 = vshrl.u32 %v633, 7
    %v635 = vsub.s32 1, %v634
    %v636 = vrot.slane %v580, %v635
    %v637 = vmul.f32 %v619, %v624
    %v638 = vmul.f32 %v619, %v628
    %v639 = vmul.f32 %v619, %v632
    %v640 = vmul.f32 %v619, %v636
    %v641 = vadd.f32 %v613, %v637
    %v642 = vadd.f32 %v614, %v638
    %v643 = vadd.f32 %v615, %v639
    %v644 = vadd.f32 %v616, %v640
    %645 = vset.pattern.permute.xlu0 2
    %646 = vperm.xlu0 %645, %v581
    %v647 = vpop.permute.xlu0 %646
    %v649 = vlaneseq
    %v650 = vshrl.u32 %v649, 7
    %v651 = vsub.s32 2, %v650
    %v652 = vrot.slane %v577, %v651
    %v653 = vlaneseq
    %v654 = vshrl.u32 %v653, 7
    %v655 = vsub.s32 2, %v654
    %v656 = vrot.slane %v578, %v655
    %v657 = vlaneseq
    %v658 = vshrl.u32 %v657, 7
    %v659 = vsub.s32 2, %v658
    %v660 = vrot.slane %v579, %v659
    %v661 = vlaneseq
    %v662 = vshrl.u32 %v661, 7
    %v663 = vsub.s32 2, %v662
    %v664 = vrot.slane %v580, %v663
    %v665 = vmul.f32 %v647, %v652
    %v666 = vmul.f32 %v647, %v656
    %v667 = vmul.f32 %v647, %v660
    %v668 = vmul.f32 %v647, %v664
    %v669 = vadd.f32 %v641, %v665
    %v670 = vadd.f32 %v642, %v666
    %v671 = vadd.f32 %v643, %v667
    %v672 = vadd.f32 %v644, %v668
    %673 = vset.pattern.permute.xlu0 3
    %674 = vperm.xlu0 %673, %v581
    %v675 = vpop.permute.xlu0 %674
    %v677 = vlaneseq
    %v678 = vshrl.u32 %v677, 7
    %v679 = vsub.s32 3, %v678
    %v680 = vrot.slane %v577, %v679
    %v681 = vlaneseq
    %v682 = vshrl.u32 %v681, 7
    %v683 = vsub.s32 3, %v682
    %v684 = vrot.slane %v578, %v683
    %v685 = vlaneseq
    %v686 = vshrl.u32 %v685, 7
    %v687 = vsub.s32 3, %v686
    %v688 = vrot.slane %v579, %v687
    %v689 = vlaneseq
    %v690 = vshrl.u32 %v689, 7
    %v691 = vsub.s32 3, %v690
    %v692 = vrot.slane %v580, %v691
    %v693 = vmul.f32 %v675, %v680
    %v694 = vmul.f32 %v675, %v684
    %v695 = vmul.f32 %v675, %v688
    %v696 = vmul.f32 %v675, %v692
    %v697 = vadd.f32 %v669, %v693
    %v698 = vadd.f32 %v670, %v694
    %v699 = vadd.f32 %v671, %v695
    %v700 = vadd.f32 %v672, %v696
    %701 = vset.pattern.permute.xlu0 4
    %702 = vperm.xlu0 %701, %v581
    %v703 = vpop.permute.xlu0 %702
    %v705 = vlaneseq
    %v706 = vshrl.u32 %v705, 7
    %v707 = vsub.s32 4, %v706
    %v708 = vrot.slane %v577, %v707
    %v709 = vlaneseq
    %v710 = vshrl.u32 %v709, 7
    %v711 = vsub.s32 4, %v710
    %v712 = vrot.slane %v578, %v711
    %v713 = vlaneseq
    %v714 = vshrl.u32 %v713, 7
    %v715 = vsub.s32 4, %v714
    %v716 = vrot.slane %v579, %v715
    %v717 = vlaneseq
    %v718 = vshrl.u32 %v717, 7
    %v719 = vsub.s32 4, %v718
    %v720 = vrot.slane %v580, %v719
    %v721 = vmul.f32 %v703, %v708
    %v722 = vmul.f32 %v703, %v712
    %v723 = vmul.f32 %v703, %v716
    %v724 = vmul.f32 %v703, %v720
    %v725 = vadd.f32 %v697, %v721
    %v726 = vadd.f32 %v698, %v722
    %v727 = vadd.f32 %v699, %v723
    %v728 = vadd.f32 %v700, %v724
    %729 = vset.pattern.permute.xlu0 5
    %730 = vperm.xlu0 %729, %v581
    %v731 = vpop.permute.xlu0 %730
    %v733 = vlaneseq
    %v734 = vshrl.u32 %v733, 7
    %v735 = vsub.s32 5, %v734
    %v736 = vrot.slane %v577, %v735
    %v737 = vlaneseq
    %v738 = vshrl.u32 %v737, 7
    %v739 = vsub.s32 5, %v738
    %v740 = vrot.slane %v578, %v739
    %v741 = vlaneseq
    %v742 = vshrl.u32 %v741, 7
    %v743 = vsub.s32 5, %v742
    %v744 = vrot.slane %v579, %v743
    %v745 = vlaneseq
    %v746 = vshrl.u32 %v745, 7
    %v747 = vsub.s32 5, %v746
    %v748 = vrot.slane %v580, %v747
    %v749 = vmul.f32 %v731, %v736
    %v750 = vmul.f32 %v731, %v740
    %v751 = vmul.f32 %v731, %v744
    %v752 = vmul.f32 %v731, %v748
    %v753 = vadd.f32 %v725, %v749
    %v754 = vadd.f32 %v726, %v750
    %v755 = vadd.f32 %v727, %v751
    %v756 = vadd.f32 %v728, %v752
    %757 = vset.pattern.permute.xlu0 6
    %758 = vperm.xlu0 %757, %v581
    %v759 = vpop.permute.xlu0 %758
    %v761 = vlaneseq
    %v762 = vshrl.u32 %v761, 7
    %v763 = vsub.s32 6, %v762
    %v764 = vrot.slane %v577, %v763
    %v765 = vlaneseq
    %v766 = vshrl.u32 %v765, 7
    %v767 = vsub.s32 6, %v766
    %v768 = vrot.slane %v578, %v767
    %v769 = vlaneseq
    %v770 = vshrl.u32 %v769, 7
    %v771 = vsub.s32 6, %v770
    %v772 = vrot.slane %v579, %v771
    %v773 = vlaneseq
    %v774 = vshrl.u32 %v773, 7
    %v775 = vsub.s32 6, %v774
    %v776 = vrot.slane %v580, %v775
    %v777 = vmul.f32 %v759, %v764
    %v778 = vmul.f32 %v759, %v768
    %v779 = vmul.f32 %v759, %v772
    %v780 = vmul.f32 %v759, %v776
    %v781 = vadd.f32 %v753, %v777
    %v782 = vadd.f32 %v754, %v778
    %v783 = vadd.f32 %v755, %v779
    %v784 = vadd.f32 %v756, %v780
    %785 = vset.pattern.permute.xlu0 7
    %786 = vperm.xlu0 %785, %v581
    %v787 = vpop.permute.xlu0 %786
    %v789 = vlaneseq
    %v790 = vshrl.u32 %v789, 7
    %v791 = vsub.s32 7, %v790
    %v792 = vrot.slane %v577, %v791
    %v793 = vlaneseq
    %v794 = vshrl.u32 %v793, 7
    %v795 = vsub.s32 7, %v794
    %v796 = vrot.slane %v578, %v795
    %v797 = vlaneseq
    %v798 = vshrl.u32 %v797, 7
    %v799 = vsub.s32 7, %v798
    %v800 = vrot.slane %v579, %v799
    %v801 = vlaneseq
    %v802 = vshrl.u32 %v801, 7
    %v803 = vsub.s32 7, %v802
    %v804 = vrot.slane %v580, %v803
    %v805 = vmul.f32 %v787, %v792
    %v806 = vmul.f32 %v787, %v796
    %v807 = vmul.f32 %v787, %v800
    %v808 = vmul.f32 %v787, %v804
    %v809 = vadd.f32 %v781, %v805
    %v810 = vadd.f32 %v782, %v806
    %v811 = vadd.f32 %v783, %v807
    %v812 = vadd.f32 %v784, %v808
    %v817 = vcombine.low %v809, %v810
    %v818 = vcombine.low %v811, %v812
    %v821 = vadd.f32 %v48, %v817
    %v822 = vadd.f32 %v49, %v818
    %s823 = scalar_lea.vmem %s1, 8
    %v824 = vld [vmem:[%s823] sm:$0xff]
    %s825 = scalar_lea.vmem %s2, 8
    %v826 = vld [vmem:[%s825] sm:$0xff]
    %828 = vset.pattern.permute.xlu0 0
    %829 = vperm.xlu0 %828, %v824
    %v830 = vpop.permute.xlu0 %829
    %v834 = vlaneseq
    %v835 = vshrl.u32 %v834, 7
    %v836 = vsub.s32 0, %v835
    %v837 = vrot.slane %v821, %v836
    %v838 = vlaneseq
    %v839 = vshrl.u32 %v838, 7
    %v840 = vsub.s32 4, %v839
    %v841 = vrot.slane %v821, %v840
    %v842 = vlaneseq
    %v843 = vshrl.u32 %v842, 7
    %v844 = vsub.s32 0, %v843
    %v845 = vrot.slane %v822, %v844
    %v846 = vlaneseq
    %v847 = vshrl.u32 %v846, 7
    %v848 = vsub.s32 4, %v847
    %v849 = vrot.slane %v822, %v848
    %v854 = vlaneseq
    %v855 = vshrl.u32 %v854, 7
    %v856 = vsub.s32 0, %v855
    %v857 = vrot.slane %v837, %v856
    %v858 = vlaneseq
    %v859 = vshrl.u32 %v858, 7
    %v860 = vsub.s32 0, %v859
    %v861 = vrot.slane %v841, %v860
    %v862 = vlaneseq
    %v863 = vshrl.u32 %v862, 7
    %v864 = vsub.s32 0, %v863
    %v865 = vrot.slane %v845, %v864
    %v866 = vlaneseq
    %v867 = vshrl.u32 %v866, 7
    %v868 = vsub.s32 0, %v867
    %v869 = vrot.slane %v849, %v868
    %v870 = vmul.f32 %v830, %v857
    %v871 = vmul.f32 %v830, %v861
    %v872 = vmul.f32 %v830, %v865
    %v873 = vmul.f32 %v830, %v869
    %875 = vset.pattern.permute.xlu0 0
    %876 = vperm.xlu0 %875, %v826
    %v877 = vpop.permute.xlu0 %876
    %v879 = vadd.f32 %v877, %v870
    %v880 = vadd.f32 %v877, %v871
    %v881 = vadd.f32 %v877, %v872
    %v882 = vadd.f32 %v877, %v873
    %883 = vset.pattern.permute.xlu0 1
    %884 = vperm.xlu0 %883, %v824
    %v885 = vpop.permute.xlu0 %884
    %v887 = vlaneseq
    %v888 = vshrl.u32 %v887, 7
    %v889 = vsub.s32 1, %v888
    %v890 = vrot.slane %v821, %v889
    %v891 = vlaneseq
    %v892 = vshrl.u32 %v891, 7
    %v893 = vsub.s32 5, %v892
    %v894 = vrot.slane %v821, %v893
    %v895 = vlaneseq
    %v896 = vshrl.u32 %v895, 7
    %v897 = vsub.s32 1, %v896
    %v898 = vrot.slane %v822, %v897
    %v899 = vlaneseq
    %v900 = vshrl.u32 %v899, 7
    %v901 = vsub.s32 5, %v900
    %v902 = vrot.slane %v822, %v901
    %v907 = vlaneseq
    %v908 = vshrl.u32 %v907, 7
    %v909 = vsub.s32 1, %v908
    %v910 = vrot.slane %v890, %v909
    %v911 = vlaneseq
    %v912 = vshrl.u32 %v911, 7
    %v913 = vsub.s32 1, %v912
    %v914 = vrot.slane %v894, %v913
    %v915 = vlaneseq
    %v916 = vshrl.u32 %v915, 7
    %v917 = vsub.s32 1, %v916
    %v918 = vrot.slane %v898, %v917
    %v919 = vlaneseq
    %v920 = vshrl.u32 %v919, 7
    %v921 = vsub.s32 1, %v920
    %v922 = vrot.slane %v902, %v921
    %v923 = vmul.f32 %v885, %v910
    %v924 = vmul.f32 %v885, %v914
    %v925 = vmul.f32 %v885, %v918
    %v926 = vmul.f32 %v885, %v922
    %v927 = vadd.f32 %v879, %v923
    %v928 = vadd.f32 %v880, %v924
    %v929 = vadd.f32 %v881, %v925
    %v930 = vadd.f32 %v882, %v926
    %931 = vset.pattern.permute.xlu0 2
    %932 = vperm.xlu0 %931, %v824
    %v933 = vpop.permute.xlu0 %932
    %v935 = vlaneseq
    %v936 = vshrl.u32 %v935, 7
    %v937 = vsub.s32 2, %v936
    %v938 = vrot.slane %v821, %v937
    %v939 = vlaneseq
    %v940 = vshrl.u32 %v939, 7
    %v941 = vsub.s32 6, %v940
    %v942 = vrot.slane %v821, %v941
    %v943 = vlaneseq
    %v944 = vshrl.u32 %v943, 7
    %v945 = vsub.s32 2, %v944
    %v946 = vrot.slane %v822, %v945
    %v947 = vlaneseq
    %v948 = vshrl.u32 %v947, 7
    %v949 = vsub.s32 6, %v948
    %v950 = vrot.slane %v822, %v949
    %v955 = vlaneseq
    %v956 = vshrl.u32 %v955, 7
    %v957 = vsub.s32 2, %v956
    %v958 = vrot.slane %v938, %v957
    %v959 = vlaneseq
    %v960 = vshrl.u32 %v959, 7
    %v961 = vsub.s32 2, %v960
    %v962 = vrot.slane %v942, %v961
    %v963 = vlaneseq
    %v964 = vshrl.u32 %v963, 7
    %v965 = vsub.s32 2, %v964
    %v966 = vrot.slane %v946, %v965
    %v967 = vlaneseq
    %v968 = vshrl.u32 %v967, 7
    %v969 = vsub.s32 2, %v968
    %v970 = vrot.slane %v950, %v969
    %v971 = vmul.f32 %v933, %v958
    %v972 = vmul.f32 %v933, %v962
    %v973 = vmul.f32 %v933, %v966
    %v974 = vmul.f32 %v933, %v970
    %v975 = vadd.f32 %v927, %v971
    %v976 = vadd.f32 %v928, %v972
    %v977 = vadd.f32 %v929, %v973
    %v978 = vadd.f32 %v930, %v974
    %979 = vset.pattern.permute.xlu0 3
    %980 = vperm.xlu0 %979, %v824
    %v981 = vpop.permute.xlu0 %980
    %v983 = vlaneseq
    %v984 = vshrl.u32 %v983, 7
    %v985 = vsub.s32 3, %v984
    %v986 = vrot.slane %v821, %v985
    %v987 = vlaneseq
    %v988 = vshrl.u32 %v987, 7
    %v989 = vsub.s32 7, %v988
    %v990 = vrot.slane %v821, %v989
    %v991 = vlaneseq
    %v992 = vshrl.u32 %v991, 7
    %v993 = vsub.s32 3, %v992
    %v994 = vrot.slane %v822, %v993
    %v995 = vlaneseq
    %v996 = vshrl.u32 %v995, 7
    %v997 = vsub.s32 7, %v996
    %v998 = vrot.slane %v822, %v997
    %v1003 = vlaneseq
    %v1004 = vshrl.u32 %v1003, 7
    %v1005 = vsub.s32 3, %v1004
    %v1006 = vrot.slane %v986, %v1005
    %v1007 = vlaneseq
    %v1008 = vshrl.u32 %v1007, 7
    %v1009 = vsub.s32 3, %v1008
    %v1010 = vrot.slane %v990, %v1009
    %v1011 = vlaneseq
    %v1012 = vshrl.u32 %v1011, 7
    %v1013 = vsub.s32 3, %v1012
    %v1014 = vrot.slane %v994, %v1013
    %v1015 = vlaneseq
    %v1016 = vshrl.u32 %v1015, 7
    %v1017 = vsub.s32 3, %v1016
    %v1018 = vrot.slane %v998, %v1017
    %v1019 = vmul.f32 %v981, %v1006
    %v1020 = vmul.f32 %v981, %v1010
    %v1021 = vmul.f32 %v981, %v1014
    %v1022 = vmul.f32 %v981, %v1018
    %v1023 = vadd.f32 %v975, %v1019
    %v1024 = vadd.f32 %v976, %v1020
    %v1025 = vadd.f32 %v977, %v1021
    %v1026 = vadd.f32 %v978, %v1022
    %vm1027 = vcmp.gt.f32.partialorder %v1023, 0.0
    %vm1028 = vcmp.gt.f32.partialorder %v1024, 0.0
    %vm1029 = vcmp.gt.f32.partialorder %v1025, 0.0
    %vm1030 = vcmp.gt.f32.partialorder %v1026, 0.0
    %s1031 = scalar_lea.vmem %s3, 8
    %v1032 = vld [vmem:[%s1031] sm:$0xff]
    %1034 = vset.pattern.permute.xlu0 0
    %1035 = vperm.xlu0 %1034, %v1032
    %v1036 = vpop.permute.xlu0 %1035
    %v1038 = vmul.f32 %v1036, %v1023
    %v1039 = vmul.f32 %v1036, %v1024
    %v1040 = vmul.f32 %v1036, %v1025
    %v1041 = vmul.f32 %v1036, %v1026
    %v1042 = vsel %vm1027, %v1023, %v1038
    %v1043 = vsel %vm1028, %v1024, %v1039
    %v1044 = vsel %vm1029, %v1025, %v1040
    %v1045 = vsel %vm1030, %v1026, %v1041
    %s1046 = scalar_lea.vmem %s4, 72
    %v1047 = vld [vmem:[%s1046] sm:$0xff]
    %v1048 = vld [vmem:[%s1046 + $0x8] sm:$0xff]
    %v1049 = vld [vmem:[%s1046 + $0x10] sm:$0xff]
    %v1050 = vld [vmem:[%s1046 + $0x18] sm:$0xff]
    %v1051 = vld [vmem:[%s1046 + $0x20] sm:$0xff]
    %v1052 = vld [vmem:[%s1046 + $0x28] sm:$0xff]
    %v1053 = vld [vmem:[%s1046 + $0x30] sm:$0xff]
    %v1054 = vld [vmem:[%s1046 + $0x38] sm:$0xff]
    %v1055 = vld [vmem:[%s1046 + $0x40] sm:$0xff]
    %1056 = vrot.lane.b32.xlu0 %v1042, 1
    %v1057 = vpop.permute.xlu0 %1056
    %1058 = vrot.lane.b32.xlu0 %v1043, 1
    %v1059 = vpop.permute.xlu0 %1058
    %1060 = vrot.lane.b32.xlu0 %v1044, 1
    %v1061 = vpop.permute.xlu0 %1060
    %1062 = vrot.lane.b32.xlu0 %v1045, 1
    %v1063 = vpop.permute.xlu0 %1062
    %v1064 = vsel %vm289, %v1061, %v1063
    %v1065 = vsel %vm289, %v1059, %v1061
    %v1066 = vsel %vm289, %v1057, %v1059
    %v1067 = vsel %vm289, %v1063, %v1057
    %v1068 = vmul.f32 %v1067, %v299
    %v1069 = vmul.f32 %v1066, %v303
    %v1070 = vmul.f32 %v1065, %v307
    %v1071 = vmul.f32 %v1064, %v311
    %1072 = vrot.lane.b32.xlu0 %v1042, 127
    %v1073 = vpop.permute.xlu0 %1072
    %1074 = vrot.lane.b32.xlu0 %v1043, 127
    %v1075 = vpop.permute.xlu0 %1074
    %1076 = vrot.lane.b32.xlu0 %v1044, 127
    %v1077 = vpop.permute.xlu0 %1076
    %1078 = vrot.lane.b32.xlu0 %v1045, 127
    %v1079 = vpop.permute.xlu0 %1078
    %v1080 = vsel %vm328, %v1077, %v1079
    %v1081 = vsel %vm328, %v1075, %v1077
    %v1082 = vsel %vm328, %v1073, %v1075
    %v1083 = vsel %vm328, %v1079, %v1073
    %v1084 = vmul.f32 %v1082, %v339
    %v1085 = vmul.f32 %v1081, %v343
    %v1086 = vmul.f32 %v1080, %v347
    %v1087 = vmul.f32 %v1083, %v351
    %1089 = vset.pattern.permute.xlu0 0
    %1090 = vperm.xlu0 %1089, %v1050
    %v1091 = vpop.permute.xlu0 %1090
    %v1093 = vmul.f32 %v1091, %v1068
    %v1094 = vmul.f32 %v1091, %v1069
    %v1095 = vmul.f32 %v1091, %v1070
    %v1096 = vmul.f32 %v1091, %v1071
    %1098 = vset.pattern.permute.xlu0 0
    %1099 = vperm.xlu0 %1098, %v1051
    %v1100 = vpop.permute.xlu0 %1099
    %v1102 = vmul.f32 %v1100, %v1042
    %v1103 = vmul.f32 %v1100, %v1043
    %v1104 = vmul.f32 %v1100, %v1044
    %v1105 = vmul.f32 %v1100, %v1045
    %v1106 = vadd.f32 %v1093, %v1102
    %v1107 = vadd.f32 %v1094, %v1103
    %v1108 = vadd.f32 %v1095, %v1104
    %v1109 = vadd.f32 %v1096, %v1105
    %1111 = vset.pattern.permute.xlu0 0
    %1112 = vperm.xlu0 %1111, %v1052
    %v1113 = vpop.permute.xlu0 %1112
    %v1115 = vmul.f32 %v1113, %v1084
    %v1116 = vmul.f32 %v1113, %v1085
    %v1117 = vmul.f32 %v1113, %v1086
    %v1118 = vmul.f32 %v1113, %v1087
    %v1119 = vadd.f32 %v1106, %v1115
    %v1120 = vadd.f32 %v1107, %v1116
    %v1121 = vadd.f32 %v1108, %v1117
    %v1122 = vadd.f32 %v1109, %v1118
    %1124 = vset.pattern.permute.xlu0 0
    %1125 = vperm.xlu0 %1124, %v1047
    %v1126 = vpop.permute.xlu0 %1125
    %v1128 = vmul.f32 %v1126, %v1068
    %v1129 = vmul.f32 %v1126, %v1069
    %v1130 = vmul.f32 %v1126, %v1070
    %v1131 = vmul.f32 %v1126, %v1071
    %1133 = vset.pattern.permute.xlu0 0
    %1134 = vperm.xlu0 %1133, %v1048
    %v1135 = vpop.permute.xlu0 %1134
    %v1137 = vmul.f32 %v1135, %v1042
    %v1138 = vmul.f32 %v1135, %v1043
    %v1139 = vmul.f32 %v1135, %v1044
    %v1140 = vmul.f32 %v1135, %v1045
    %v1141 = vadd.f32 %v1128, %v1137
    %v1142 = vadd.f32 %v1129, %v1138
    %v1143 = vadd.f32 %v1130, %v1139
    %v1144 = vadd.f32 %v1131, %v1140
    %1146 = vset.pattern.permute.xlu0 0
    %1147 = vperm.xlu0 %1146, %v1049
    %v1148 = vpop.permute.xlu0 %1147
    %v1150 = vmul.f32 %v1148, %v1084
    %v1151 = vmul.f32 %v1148, %v1085
    %v1152 = vmul.f32 %v1148, %v1086
    %v1153 = vmul.f32 %v1148, %v1087
    %v1154 = vadd.f32 %v1141, %v1150
    %v1155 = vadd.f32 %v1142, %v1151
    %v1156 = vadd.f32 %v1143, %v1152
    %v1157 = vadd.f32 %v1144, %v1153
    %1158 = vrot.lane.b32.xlu0 %v1154, 16
    %v1159 = vpop.permute.xlu0 %1158
    %1160 = vrot.lane.b32.xlu0 %v1155, 16
    %v1161 = vpop.permute.xlu0 %1160
    %1162 = vrot.lane.b32.xlu0 %v1156, 16
    %v1163 = vpop.permute.xlu0 %1162
    %1164 = vrot.lane.b32.xlu0 %v1157, 16
    %v1165 = vpop.permute.xlu0 %1164
    %v1166 = vsel %vm438, %v1163, %v1165
    %v1167 = vsel %vm438, %v1161, %v1163
    %v1168 = vsel %vm438, %v1159, %v1161
    %v1169 = vsel %vm438, %v1165, %v1159
    %v1170 = vmul.f32 %v1169, %v449
    %v1171 = vmul.f32 %v1168, %v453
    %v1172 = vmul.f32 %v1167, %v457
    %v1173 = vmul.f32 %v1166, %v461
    %v1174 = vadd.f32 %v1119, %v1170
    %v1175 = vadd.f32 %v1120, %v1171
    %v1176 = vadd.f32 %v1121, %v1172
    %v1177 = vadd.f32 %v1122, %v1173
    %1179 = vset.pattern.permute.xlu0 0
    %1180 = vperm.xlu0 %1179, %v1053
    %v1181 = vpop.permute.xlu0 %1180
    %v1183 = vmul.f32 %v1181, %v1068
    %v1184 = vmul.f32 %v1181, %v1069
    %v1185 = vmul.f32 %v1181, %v1070
    %v1186 = vmul.f32 %v1181, %v1071
    %1188 = vset.pattern.permute.xlu0 0
    %1189 = vperm.xlu0 %1188, %v1054
    %v1190 = vpop.permute.xlu0 %1189
    %v1192 = vmul.f32 %v1190, %v1042
    %v1193 = vmul.f32 %v1190, %v1043
    %v1194 = vmul.f32 %v1190, %v1044
    %v1195 = vmul.f32 %v1190, %v1045
    %v1196 = vadd.f32 %v1183, %v1192
    %v1197 = vadd.f32 %v1184, %v1193
    %v1198 = vadd.f32 %v1185, %v1194
    %v1199 = vadd.f32 %v1186, %v1195
    %1201 = vset.pattern.permute.xlu0 0
    %1202 = vperm.xlu0 %1201, %v1055
    %v1203 = vpop.permute.xlu0 %1202
    %v1205 = vmul.f32 %v1203, %v1084
    %v1206 = vmul.f32 %v1203, %v1085
    %v1207 = vmul.f32 %v1203, %v1086
    %v1208 = vmul.f32 %v1203, %v1087
    %v1209 = vadd.f32 %v1196, %v1205
    %v1210 = vadd.f32 %v1197, %v1206
    %v1211 = vadd.f32 %v1198, %v1207
    %v1212 = vadd.f32 %v1199, %v1208
    %1213 = vrot.lane.b32.xlu0 %v1209, 112
    %v1214 = vpop.permute.xlu0 %1213
    %1215 = vrot.lane.b32.xlu0 %v1210, 112
    %v1216 = vpop.permute.xlu0 %1215
    %1217 = vrot.lane.b32.xlu0 %v1211, 112
    %v1218 = vpop.permute.xlu0 %1217
    %1219 = vrot.lane.b32.xlu0 %v1212, 112
    %v1220 = vpop.permute.xlu0 %1219
    %v1221 = vsel %vm517, %v1218, %v1220
    %v1222 = vsel %vm517, %v1216, %v1218
    %v1223 = vsel %vm517, %v1214, %v1216
    %v1224 = vsel %vm517, %v1220, %v1214
    %v1225 = vmul.f32 %v1223, %v528
    %v1226 = vmul.f32 %v1222, %v532
    %v1227 = vmul.f32 %v1221, %v536
    %v1228 = vmul.f32 %v1224, %v540
    %v1229 = vadd.f32 %v1174, %v1225
    %v1230 = vadd.f32 %v1175, %v1226
    %v1231 = vadd.f32 %v1176, %v1227
    %v1232 = vadd.f32 %v1177, %v1228
    %s1233 = scalar_lea.vmem %s5, 8
    %v1234 = vld [vmem:[%s1233] sm:$0xff]
    %1236 = vset.pattern.permute.xlu0 0
    %1237 = vperm.xlu0 %1236, %v1234
    %v1238 = vpop.permute.xlu0 %1237
    %v1240 = vadd.f32 %v1229, %v1238
    %v1241 = vadd.f32 %v1230, %v1238
    %v1242 = vadd.f32 %v1231, %v1238
    %v1243 = vadd.f32 %v1232, %v1238
    %vm1244 = vcmp.gt.f32.partialorder %v1240, 0.0
    %vm1245 = vcmp.gt.f32.partialorder %v1241, 0.0
    %vm1246 = vcmp.gt.f32.partialorder %v1242, 0.0
    %vm1247 = vcmp.gt.f32.partialorder %v1243, 0.0
    %s1248 = scalar_lea.vmem %s6, 8
    %v1249 = vld [vmem:[%s1248] sm:$0xff]
    %1251 = vset.pattern.permute.xlu0 0
    %1252 = vperm.xlu0 %1251, %v1249
    %v1253 = vpop.permute.xlu0 %1252
    %v1255 = vmul.f32 %v1253, %v1240
    %v1256 = vmul.f32 %v1253, %v1241
    %v1257 = vmul.f32 %v1253, %v1242
    %v1258 = vmul.f32 %v1253, %v1243
    %v1259 = vsel %vm1244, %v1240, %v1255
    %v1260 = vsel %vm1245, %v1241, %v1256
    %v1261 = vsel %vm1246, %v1242, %v1257
    %v1262 = vsel %vm1247, %v1243, %v1258
    %s1263 = scalar_lea.vmem %s7, 4
    %v1264 = vld [vmem:[%s1263] sm:$0xf]
    %s1265 = scalar_lea.vmem %s8, 4
    %v1266 = vld [vmem:[%s1265] sm:$0xf]
    %1268 = vset.pattern.permute.xlu0 0
    %1269 = vperm.xlu0 %1268, %v1264
    %v1270 = vpop.permute.xlu0 %1269
    %v1272 = vlaneseq
    %v1273 = vshrl.u32 %v1272, 7
    %v1274 = vsub.s32 0, %v1273
    %v1275 = vrot.slane %v1259, %v1274
    %v1276 = vlaneseq
    %v1277 = vshrl.u32 %v1276, 7
    %v1278 = vsub.s32 0, %v1277
    %v1279 = vrot.slane %v1260, %v1278
    %v1280 = vlaneseq
    %v1281 = vshrl.u32 %v1280, 7
    %v1282 = vsub.s32 0, %v1281
    %v1283 = vrot.slane %v1261, %v1282
    %v1284 = vlaneseq
    %v1285 = vshrl.u32 %v1284, 7
    %v1286 = vsub.s32 0, %v1285
    %v1287 = vrot.slane %v1262, %v1286
    %v1288 = vmul.f32 %v1270, %v1275
    %v1289 = vmul.f32 %v1270, %v1279
    %v1290 = vmul.f32 %v1270, %v1283
    %v1291 = vmul.f32 %v1270, %v1287
    %1293 = vset.pattern.permute.xlu0 0
    %1294 = vperm.xlu0 %1293, %v1266
    %v1295 = vpop.permute.xlu0 %1294
    %v1297 = vadd.f32 %v1295, %v1288
    %v1298 = vadd.f32 %v1295, %v1289
    %v1299 = vadd.f32 %v1295, %v1290
    %v1300 = vadd.f32 %v1295, %v1291
    %1301 = vset.pattern.permute.xlu0 1
    %1302 = vperm.xlu0 %1301, %v1264
    %v1303 = vpop.permute.xlu0 %1302
    %v1305 = vlaneseq
    %v1306 = vshrl.u32 %v1305, 7
    %v1307 = vsub.s32 1, %v1306
    %v1308 = vrot.slane %v1259, %v1307
    %v1309 = vlaneseq
    %v1310 = vshrl.u32 %v1309, 7
    %v1311 = vsub.s32 1, %v1310
    %v1312 = vrot.slane %v1260, %v1311
    %v1313 = vlaneseq
    %v1314 = vshrl.u32 %v1313, 7
    %v1315 = vsub.s32 1, %v1314
    %v1316 = vrot.slane %v1261, %v1315
    %v1317 = vlaneseq
    %v1318 = vshrl.u32 %v1317, 7
    %v1319 = vsub.s32 1, %v1318
    %v1320 = vrot.slane %v1262, %v1319
    %v1321 = vmul.f32 %v1303, %v1308
    %v1322 = vmul.f32 %v1303, %v1312
    %v1323 = vmul.f32 %v1303, %v1316
    %v1324 = vmul.f32 %v1303, %v1320
    %v1325 = vadd.f32 %v1297, %v1321
    %v1326 = vadd.f32 %v1298, %v1322
    %v1327 = vadd.f32 %v1299, %v1323
    %v1328 = vadd.f32 %v1300, %v1324
    %1329 = vset.pattern.permute.xlu0 2
    %1330 = vperm.xlu0 %1329, %v1264
    %v1331 = vpop.permute.xlu0 %1330
    %v1333 = vlaneseq
    %v1334 = vshrl.u32 %v1333, 7
    %v1335 = vsub.s32 2, %v1334
    %v1336 = vrot.slane %v1259, %v1335
    %v1337 = vlaneseq
    %v1338 = vshrl.u32 %v1337, 7
    %v1339 = vsub.s32 2, %v1338
    %v1340 = vrot.slane %v1260, %v1339
    %v1341 = vlaneseq
    %v1342 = vshrl.u32 %v1341, 7
    %v1343 = vsub.s32 2, %v1342
    %v1344 = vrot.slane %v1261, %v1343
    %v1345 = vlaneseq
    %v1346 = vshrl.u32 %v1345, 7
    %v1347 = vsub.s32 2, %v1346
    %v1348 = vrot.slane %v1262, %v1347
    %v1349 = vmul.f32 %v1331, %v1336
    %v1350 = vmul.f32 %v1331, %v1340
    %v1351 = vmul.f32 %v1331, %v1344
    %v1352 = vmul.f32 %v1331, %v1348
    %v1353 = vadd.f32 %v1325, %v1349
    %v1354 = vadd.f32 %v1326, %v1350
    %v1355 = vadd.f32 %v1327, %v1351
    %v1356 = vadd.f32 %v1328, %v1352
    %1357 = vset.pattern.permute.xlu0 3
    %1358 = vperm.xlu0 %1357, %v1264
    %v1359 = vpop.permute.xlu0 %1358
    %v1361 = vlaneseq
    %v1362 = vshrl.u32 %v1361, 7
    %v1363 = vsub.s32 3, %v1362
    %v1364 = vrot.slane %v1259, %v1363
    %v1365 = vlaneseq
    %v1366 = vshrl.u32 %v1365, 7
    %v1367 = vsub.s32 3, %v1366
    %v1368 = vrot.slane %v1260, %v1367
    %v1369 = vlaneseq
    %v1370 = vshrl.u32 %v1369, 7
    %v1371 = vsub.s32 3, %v1370
    %v1372 = vrot.slane %v1261, %v1371
    %v1373 = vlaneseq
    %v1374 = vshrl.u32 %v1373, 7
    %v1375 = vsub.s32 3, %v1374
    %v1376 = vrot.slane %v1262, %v1375
    %v1377 = vmul.f32 %v1359, %v1364
    %v1378 = vmul.f32 %v1359, %v1368
    %v1379 = vmul.f32 %v1359, %v1372
    %v1380 = vmul.f32 %v1359, %v1376
    %v1381 = vadd.f32 %v1353, %v1377
    %v1382 = vadd.f32 %v1354, %v1378
    %v1383 = vadd.f32 %v1355, %v1379
    %v1384 = vadd.f32 %v1356, %v1380
    %1385 = vset.pattern.permute.xlu0 4
    %1386 = vperm.xlu0 %1385, %v1264
    %v1387 = vpop.permute.xlu0 %1386
    %v1389 = vlaneseq
    %v1390 = vshrl.u32 %v1389, 7
    %v1391 = vsub.s32 4, %v1390
    %v1392 = vrot.slane %v1259, %v1391
    %v1393 = vlaneseq
    %v1394 = vshrl.u32 %v1393, 7
    %v1395 = vsub.s32 4, %v1394
    %v1396 = vrot.slane %v1260, %v1395
    %v1397 = vlaneseq
    %v1398 = vshrl.u32 %v1397, 7
    %v1399 = vsub.s32 4, %v1398
    %v1400 = vrot.slane %v1261, %v1399
    %v1401 = vlaneseq
    %v1402 = vshrl.u32 %v1401, 7
    %v1403 = vsub.s32 4, %v1402
    %v1404 = vrot.slane %v1262, %v1403
    %v1405 = vmul.f32 %v1387, %v1392
    %v1406 = vmul.f32 %v1387, %v1396
    %v1407 = vmul.f32 %v1387, %v1400
    %v1408 = vmul.f32 %v1387, %v1404
    %v1409 = vadd.f32 %v1381, %v1405
    %v1410 = vadd.f32 %v1382, %v1406
    %v1411 = vadd.f32 %v1383, %v1407
    %v1412 = vadd.f32 %v1384, %v1408
    %1413 = vset.pattern.permute.xlu0 5
    %1414 = vperm.xlu0 %1413, %v1264
    %v1415 = vpop.permute.xlu0 %1414
    %v1417 = vlaneseq
    %v1418 = vshrl.u32 %v1417, 7
    %v1419 = vsub.s32 5, %v1418
    %v1420 = vrot.slane %v1259, %v1419
    %v1421 = vlaneseq
    %v1422 = vshrl.u32 %v1421, 7
    %v1423 = vsub.s32 5, %v1422
    %v1424 = vrot.slane %v1260, %v1423
    %v1425 = vlaneseq
    %v1426 = vshrl.u32 %v1425, 7
    %v1427 = vsub.s32 5, %v1426
    %v1428 = vrot.slane %v1261, %v1427
    %v1429 = vlaneseq
    %v1430 = vshrl.u32 %v1429, 7
    %v1431 = vsub.s32 5, %v1430
    %v1432 = vrot.slane %v1262, %v1431
    %v1433 = vmul.f32 %v1415, %v1420
    %v1434 = vmul.f32 %v1415, %v1424
    %v1435 = vmul.f32 %v1415, %v1428
    %v1436 = vmul.f32 %v1415, %v1432
    %v1437 = vadd.f32 %v1409, %v1433
    %v1438 = vadd.f32 %v1410, %v1434
    %v1439 = vadd.f32 %v1411, %v1435
    %v1440 = vadd.f32 %v1412, %v1436
    %1441 = vset.pattern.permute.xlu0 6
    %1442 = vperm.xlu0 %1441, %v1264
    %v1443 = vpop.permute.xlu0 %1442
    %v1445 = vlaneseq
    %v1446 = vshrl.u32 %v1445, 7
    %v1447 = vsub.s32 6, %v1446
    %v1448 = vrot.slane %v1259, %v1447
    %v1449 = vlaneseq
    %v1450 = vshrl.u32 %v1449, 7
    %v1451 = vsub.s32 6, %v1450
    %v1452 = vrot.slane %v1260, %v1451
    %v1453 = vlaneseq
    %v1454 = vshrl.u32 %v1453, 7
    %v1455 = vsub.s32 6, %v1454
    %v1456 = vrot.slane %v1261, %v1455
    %v1457 = vlaneseq
    %v1458 = vshrl.u32 %v1457, 7
    %v1459 = vsub.s32 6, %v1458
    %v1460 = vrot.slane %v1262, %v1459
    %v1461 = vmul.f32 %v1443, %v1448
    %v1462 = vmul.f32 %v1443, %v1452
    %v1463 = vmul.f32 %v1443, %v1456
    %v1464 = vmul.f32 %v1443, %v1460
    %v1465 = vadd.f32 %v1437, %v1461
    %v1466 = vadd.f32 %v1438, %v1462
    %v1467 = vadd.f32 %v1439, %v1463
    %v1468 = vadd.f32 %v1440, %v1464
    %1469 = vset.pattern.permute.xlu0 7
    %1470 = vperm.xlu0 %1469, %v1264
    %v1471 = vpop.permute.xlu0 %1470
    %v1473 = vlaneseq
    %v1474 = vshrl.u32 %v1473, 7
    %v1475 = vsub.s32 7, %v1474
    %v1476 = vrot.slane %v1259, %v1475
    %v1477 = vlaneseq
    %v1478 = vshrl.u32 %v1477, 7
    %v1479 = vsub.s32 7, %v1478
    %v1480 = vrot.slane %v1260, %v1479
    %v1481 = vlaneseq
    %v1482 = vshrl.u32 %v1481, 7
    %v1483 = vsub.s32 7, %v1482
    %v1484 = vrot.slane %v1261, %v1483
    %v1485 = vlaneseq
    %v1486 = vshrl.u32 %v1485, 7
    %v1487 = vsub.s32 7, %v1486
    %v1488 = vrot.slane %v1262, %v1487
    %v1489 = vmul.f32 %v1471, %v1476
    %v1490 = vmul.f32 %v1471, %v1480
    %v1491 = vmul.f32 %v1471, %v1484
    %v1492 = vmul.f32 %v1471, %v1488
    %v1493 = vadd.f32 %v1465, %v1489
    %v1494 = vadd.f32 %v1466, %v1490
    %v1495 = vadd.f32 %v1467, %v1491
    %v1496 = vadd.f32 %v1468, %v1492
    %v1501 = vcombine.low %v1493, %v1494
    %v1502 = vcombine.low %v1495, %v1496
    %v1505 = vadd.f32 %v821, %v1501
    %v1506 = vadd.f32 %v822, %v1502
    %1507 = vst [vmem:[#allocation5] sm:$0xff] %v1505
    %1508 = vst [vmem:[#allocation5 + $0x8] sm:$0xff] %v1506
    // Predicated region
    $region46: #{residual_forward.1} parent=1 // pred_check
      _
    $region47: #{residual_forward.1} parent=1 // pred_check_branch
      %1510 = sbr.rel (0) target = $region49
    $region48: #{residual_forward.1} parent=1 // pred_region
      %s1512 = ssub.s32 256, 256
      %1513 = vsyncadd [#allocation4], %s1512
      %s1515 = sshll.u32 [#allocation5], 4
      %s1516 = int_to_ptr.vmem [resolvable:$true] %s1515
      %1518 = dma.vmem_to_hbm [thread:$0]  %s1516, 256, %s10, [#allocation4]
    $region49: #{residual_forward.1} parent=1 // pred_fallthru
      _
    // Predicated region
    $region50: #{residual_forward.1} parent=1 // pred_check
      _
    $region51: #{residual_forward.1} parent=1 // pred_check_branch
      %1520 = sbr.rel (0) target = $region53
    $region52: #{residual_forward.1} parent=1 // pred_region
      %1521 = dma.done [#allocation4], 256
    $region53: #{residual_forward.1} parent=1 // pred_fallthru
      _
    %1522 = vsyncpa [#allocation3], 1
    %1523 = vsyncpa [#allocation4], 1

</llo_original>
